<compile_context>
chip_gen: v5e
topology: v5e:2x2
jax: 0.10.0
libtpu: 0.0.40
codegen_flags: <defaults>
</compile_context>

<pallas_src>
import jax
import jax.numpy as jnp
from jax.experimental import pallas as pl
from jax.experimental.pallas import tpu as pltpu

_LANE = 128


# ----------------------------------------------------------------------------
# Kernel 1: embedding gather   h = W_A^T[idx] + b_A
# ----------------------------------------------------------------------------
def _gather_kernel(idx_ref, ba_ref, wa_hbm, h_ref, h_buf, sems):
    # idx_ref : (N,)   int32  SMEM   token indices
    # ba_ref  : (1, E) f32    VMEM   layer_A bias
    # wa_hbm  : (V, E) f32    HBM    layer_A.weight^T (only N rows are fetched)
    # h_ref   : (N, E) f32    VMEM   output embeddings
    # h_buf   : (N, E) f32    VMEM   scratch DMA landing buffer
    # sems    : (N,)          DMA semaphores
    n = h_ref.shape[0]
    copies = []
    # N is small & static -> trace-time unrolled; all DMAs overlap.
    for i in range(n):
        row = idx_ref[i]
        cp = pltpu.make_async_copy(
            wa_hbm.at[pl.ds(row, 1), :], h_buf.at[pl.ds(i, 1), :], sems.at[i]
        )
        cp.start()
        copies.append(cp)
    for cp in copies:
        cp.wait()
    h_ref[...] = h_buf[...] + ba_ref[...]


# ----------------------------------------------------------------------------
# Kernel 2: logits tile + softmax over dim 0 (per-column, tile-independent)
# ----------------------------------------------------------------------------
def _proj_softmax_kernel(h_ref, wb_ref, bb_ref, out_ref):
    # h_ref  : (N, E)  f32    embeddings (resident across the V grid)
    # wb_ref : (E, TV) bf16   streamed tile of layer_B.weight^T
    # bb_ref : (1, TV) f32    streamed tile of layer_B bias
    # out_ref: (N, TV) f32    softmax(dim=0) of this logit tile
    h = h_ref[...].astype(jnp.bfloat16)
    logits = jnp.dot(h, wb_ref[...], preferred_element_type=jnp.float32)
    logits = logits + bb_ref[...]
    # Softmax over dim 0 (rows).  Every row of a column lives in this tile, so
    # no cross-tile state is needed and the V grid axis is fully parallel.
    # TODO(synk): for very large N, add an "arbitrary" N grid axis with running
    # per-column max/sum (online column softmax); here N stays fully resident.
    m = jnp.max(logits, axis=0, keepdims=True)            # (1, TV)
    e = jnp.exp(logits - m)                                # (N, TV)
    s = jnp.sum(e, axis=0, keepdims=True)                  # (1, TV)
    out_ref[...] = e * pl.reciprocal(s, approx=True)       # EUP rcp + VPU mul


# ----------------------------------------------------------------------------
# Host-side wrappers
# ----------------------------------------------------------------------------
def _pick_v_tile(v_padded):
    for tv in (2048, 1024, 512, 256, 128):
        if v_padded % tv == 0:
            return tv
    return v_padded


def prepare_params(w_a, b_a, w_b, b_b):
    """Hoist transposes / casts / lane padding out of the per-call path.

    w_a: (E, V) layer_A.weight,  b_a: (E,)
    w_b: (V, E) layer_B.weight,  b_b: (V,)
    """
    embed_size, voc_size = w_a.shape
    assert w_b.shape == (voc_size, embed_size)
    v_padded = _LANE * pl.cdiv(voc_size, _LANE)

    wa_t = jnp.asarray(w_a, jnp.float32).T                         # (V, E) f32
    ba = jnp.asarray(b_a, jnp.float32).reshape(1, embed_size)      # (1, E) f32
    wb_t = jnp.asarray(w_b, jnp.float32).T.astype(jnp.bfloat16)    # (E, V) bf16
    bb = jnp.asarray(b_b, jnp.float32).reshape(1, voc_size)        # (1, V) f32
    if v_padded != voc_size:
        pad = v_padded - voc_size
        wb_t = jnp.pad(wb_t, ((0, 0), (0, pad)))
        bb = jnp.pad(bb, ((0, 0), (0, pad)))
    return {"wa_t": wa_t, "ba": ba, "wb_t": wb_t, "bb": bb,
            "voc_size": voc_size}


def fasttext_forward(token_ids, params, get_embed=False):
    wa_t, ba = params["wa_t"], params["ba"]
    wb_t, bb = params["wb_t"], params["bb"]
    voc_size = params["voc_size"]
    v, e = wa_t.shape
    vp = wb_t.shape[1]

    idx = token_ids.reshape(-1).astype(jnp.int32)
    # torch.nn.functional.one_hot errors on out-of-range ids; the Pallas gather
    # has no runtime bounds check, so clamp defensively.
    idx = jnp.clip(idx, 0, voc_size - 1)
    n = idx.shape[0]

    vmem = pl.BlockSpec(memory_space=pltpu.MemorySpace.VMEM)
    smem = pl.BlockSpec(memory_space=pltpu.MemorySpace.SMEM)
    hbm = pl.BlockSpec(memory_space=pl.ANY)

    # --- layer_A as an embedding-row gather (manual DMA, no one-hot) --------
    h = pl.pallas_call(
        _gather_kernel,
        out_shape=jax.ShapeDtypeStruct((n, e), jnp.float32),
        in_specs=[smem, vmem, hbm],
        out_specs=vmem,
        scratch_shapes=[
            pltpu.VMEM((n, e), jnp.float32),
            pltpu.SemaphoreType.DMA((n,)),
        ],
    )(idx, ba, wa_t)
    if get_embed:
        return h

    # --- layer_B + softmax(dim=0), streamed over lane-dense vocab tiles -----
    tv = _pick_v_tile(vp)
    out_padded = pl.pallas_call(
        _proj_softmax_kernel,
        out_shape=jax.ShapeDtypeStruct((n, vp), jnp.float32),
        grid=(vp // tv,),
        in_specs=[
            pl.BlockSpec((n, e), lambda j: (0, 0)),    # h: resident
            pl.BlockSpec((e, tv), lambda j: (0, j)),   # W_B^T: streamed (bf16)
            pl.BlockSpec((1, tv), lambda j: (0, j)),   # b_B: streamed
        ],
        out_specs=pl.BlockSpec((n, tv), lambda j: (0, j)),
        compiler_params=pltpu.CompilerParams(
            dimension_semantics=("parallel",),  # column softmax: tiles independent
        ),
    )(h, wb_t, bb)
    return out_padded[:, :voc_size]


if __name__ == "__main__":
    # Small synthetic configuration consistent with the module.
    voc_size = 300      # len(dictionary); not 128-aligned -> exercises padding
    embed_size = 32
    batch, seq = 2, 8   # -> N = 16 flattened tokens

    key = jax.random.PRNGKey(0)
    k_tok, k_wa, k_ba, k_wb, k_bb = jax.random.split(key, 5)

    token_ids = jax.random.randint(k_tok, (batch, seq), 0, voc_size, jnp.int32)

    # torch.nn.Linear shapes: weight (out_features, in_features).
    w_a = 0.02 * jax.random.normal(k_wa, (embed_size, voc_size), jnp.float32)
    b_a = 0.02 * jax.random.normal(k_ba, (embed_size,), jnp.float32)
    w_b = 0.02 * jax.random.normal(k_wb, (voc_size, embed_size), jnp.float32)
    b_b = 0.02 * jax.random.normal(k_bb, (voc_size,), jnp.float32)

    params = prepare_params(w_a, b_a, w_b, b_b)

    out = jax.block_until_ready(fasttext_forward(token_ids, params))
    emb = jax.block_until_ready(
        fasttext_forward(token_ids, params, get_embed=True))

    # Reference check in plain JAX (f32, same math, softmax over dim 0).
    onehot = jax.nn.one_hot(token_ids.reshape(-1), voc_size, dtype=jnp.float32)
    h_ref = onehot @ w_a.T + b_a
    logits_ref = h_ref @ w_b.T + b_b
    ref = jax.nn.softmax(logits_ref, axis=0)

    assert out.shape == (batch * seq, voc_size)
    assert emb.shape == (batch * seq, embed_size)
    # Gather path is f32 -> tight tolerance.
    assert jnp.allclose(emb, h_ref, atol=1e-5, rtol=1e-5), \
        float(jnp.abs(emb - h_ref).max())
    # bf16 W_B + approximate reciprocal -> loosened tolerance vs pure f32.
    assert jnp.allclose(out, ref, atol=1e-3, rtol=1e-2), \
        float(jnp.abs(out - ref).max())

    print("KERNEL_OK")
</pallas_src>

<mosaic_0001>
module attributes {stable_mosaic.version = 11 : i64} {
  func.func @_gather_kernel(%arg0: memref<16xi32, #tpu.memory_space<smem>>, %arg1: memref<1x32xf32, #tpu.memory_space<vmem>>, %arg2: memref<300x32xf32, #tpu.memory_space<any>>, %arg3: memref<16x32xf32, #tpu.memory_space<vmem>>, %arg4: memref<16x32xf32, #tpu.memory_space<vmem>>, %arg5: memref<16x!tpu.dma_semaphore, #tpu.memory_space<semaphore_mem>>) attributes {dimension_semantics = [], scalar_prefetch = 0 : i64, scratch_operands = 2 : i64, tpu.core_type = #tpu.core_type<tc>} {
    %c0 = arith.constant 0 : index
    %0 = memref.load %arg0[%c0] : memref<16xi32, #tpu.memory_space<smem>>
    %c0_i32 = arith.constant 0 : i32
    %c0_i32_0 = arith.constant 0 : i32
    %1 = tpu.memref_slice %arg2[%0, %c0_i32_0] : memref<300x32xf32, #tpu.memory_space<any>> -> memref<1x32xf32, #tpu.memory_space<any>>
    %c0_i32_1 = arith.constant 0 : i32
    %c0_i32_2 = arith.constant 0 : i32
    %2 = tpu.memref_slice %arg4[%c0_i32_1, %c0_i32_2] : memref<16x32xf32, #tpu.memory_space<vmem>> -> memref<1x32xf32, #tpu.memory_space<vmem>>
    %3 = tpu.memref_slice %arg5[%c0_i32] : memref<16x!tpu.dma_semaphore, #tpu.memory_space<semaphore_mem>> -> memref<1x!tpu.dma_semaphore, #tpu.memory_space<semaphore_mem>>
    %4 = tpu.memref_squeeze %3 : memref<1x!tpu.dma_semaphore, #tpu.memory_space<semaphore_mem>> -> memref<!tpu.dma_semaphore, #tpu.memory_space<semaphore_mem>>
    tpu.enqueue_dma source(%1 : memref<1x32xf32, #tpu.memory_space<any>>) target(%2 : memref<1x32xf32, #tpu.memory_space<vmem>>) target_semaphore(%4 : memref<!tpu.dma_semaphore, #tpu.memory_space<semaphore_mem>>)
    %c1 = arith.constant 1 : index
    %5 = memref.load %arg0[%c1] : memref<16xi32, #tpu.memory_space<smem>>
    %c1_i32 = arith.constant 1 : i32
    %c0_i32_3 = arith.constant 0 : i32
    %6 = tpu.memref_slice %arg2[%5, %c0_i32_3] : memref<300x32xf32, #tpu.memory_space<any>> -> memref<1x32xf32, #tpu.memory_space<any>>
    %c1_i32_4 = arith.constant 1 : i32
    %c0_i32_5 = arith.constant 0 : i32
    %7 = tpu.memref_slice %arg4[%c1_i32_4, %c0_i32_5] : memref<16x32xf32, #tpu.memory_space<vmem>> -> memref<1x32xf32, #tpu.memory_space<vmem>>
    %8 = tpu.memref_slice %arg5[%c1_i32] : memref<16x!tpu.dma_semaphore, #tpu.memory_space<semaphore_mem>> -> memref<1x!tpu.dma_semaphore, #tpu.memory_space<semaphore_mem>>
    %9 = tpu.memref_squeeze %8 : memref<1x!tpu.dma_semaphore, #tpu.memory_space<semaphore_mem>> -> memref<!tpu.dma_semaphore, #tpu.memory_space<semaphore_mem>>
    tpu.enqueue_dma source(%6 : memref<1x32xf32, #tpu.memory_space<any>>) target(%7 : memref<1x32xf32, #tpu.memory_space<vmem>>) target_semaphore(%9 : memref<!tpu.dma_semaphore, #tpu.memory_space<semaphore_mem>>)
    %c2 = arith.constant 2 : index
    %10 = memref.load %arg0[%c2] : memref<16xi32, #tpu.memory_space<smem>>
    %c2_i32 = arith.constant 2 : i32
    %c0_i32_6 = arith.constant 0 : i32
    %11 = tpu.memref_slice %arg2[%10, %c0_i32_6] : memref<300x32xf32, #tpu.memory_space<any>> -> memref<1x32xf32, #tpu.memory_space<any>>
    %c2_i32_7 = arith.constant 2 : i32
    %c0_i32_8 = arith.constant 0 : i32
    %12 = tpu.memref_slice %arg4[%c2_i32_7, %c0_i32_8] : memref<16x32xf32, #tpu.memory_space<vmem>> -> memref<1x32xf32, #tpu.memory_space<vmem>>
    %13 = tpu.memref_slice %arg5[%c2_i32] : memref<16x!tpu.dma_semaphore, #tpu.memory_space<semaphore_mem>> -> memref<1x!tpu.dma_semaphore, #tpu.memory_space<semaphore_mem>>
    %14 = tpu.memref_squeeze %13 : memref<1x!tpu.dma_semaphore, #tpu.memory_space<semaphore_mem>> -> memref<!tpu.dma_semaphore, #tpu.memory_space<semaphore_mem>>
    tpu.enqueue_dma source(%11 : memref<1x32xf32, #tpu.memory_space<any>>) target(%12 : memref<1x32xf32, #tpu.memory_space<vmem>>) target_semaphore(%14 : memref<!tpu.dma_semaphore, #tpu.memory_space<semaphore_mem>>)
    %c3 = arith.constant 3 : index
    %15 = memref.load %arg0[%c3] : memref<16xi32, #tpu.memory_space<smem>>
    %c3_i32 = arith.constant 3 : i32
    %c0_i32_9 = arith.constant 0 : i32
    %16 = tpu.memref_slice %arg2[%15, %c0_i32_9] : memref<300x32xf32, #tpu.memory_space<any>> -> memref<1x32xf32, #tpu.memory_space<any>>
    %c3_i32_10 = arith.constant 3 : i32
    %c0_i32_11 = arith.constant 0 : i32
    %17 = tpu.memref_slice %arg4[%c3_i32_10, %c0_i32_11] : memref<16x32xf32, #tpu.memory_space<vmem>> -> memref<1x32xf32, #tpu.memory_space<vmem>>
    %18 = tpu.memref_slice %arg5[%c3_i32] : memref<16x!tpu.dma_semaphore, #tpu.memory_space<semaphore_mem>> -> memref<1x!tpu.dma_semaphore, #tpu.memory_space<semaphore_mem>>
    %19 = tpu.memref_squeeze %18 : memref<1x!tpu.dma_semaphore, #tpu.memory_space<semaphore_mem>> -> memref<!tpu.dma_semaphore, #tpu.memory_space<semaphore_mem>>
    tpu.enqueue_dma source(%16 : memref<1x32xf32, #tpu.memory_space<any>>) target(%17 : memref<1x32xf32, #tpu.memory_space<vmem>>) target_semaphore(%19 : memref<!tpu.dma_semaphore, #tpu.memory_space<semaphore_mem>>)
    %c4 = arith.constant 4 : index
    %20 = memref.load %arg0[%c4] : memref<16xi32, #tpu.memory_space<smem>>
    %c4_i32 = arith.constant 4 : i32
    %c0_i32_12 = arith.constant 0 : i32
    %21 = tpu.memref_slice %arg2[%20, %c0_i32_12] : memref<300x32xf32, #tpu.memory_space<any>> -> memref<1x32xf32, #tpu.memory_space<any>>
    %c4_i32_13 = arith.constant 4 : i32
    %c0_i32_14 = arith.constant 0 : i32
    %22 = tpu.memref_slice %arg4[%c4_i32_13, %c0_i32_14] : memref<16x32xf32, #tpu.memory_space<vmem>> -> memref<1x32xf32, #tpu.memory_space<vmem>>
    %23 = tpu.memref_slice %arg5[%c4_i32] : memref<16x!tpu.dma_semaphore, #tpu.memory_space<semaphore_mem>> -> memref<1x!tpu.dma_semaphore, #tpu.memory_space<semaphore_mem>>
    %24 = tpu.memref_squeeze %23 : memref<1x!tpu.dma_semaphore, #tpu.memory_space<semaphore_mem>> -> memref<!tpu.dma_semaphore, #tpu.memory_space<semaphore_mem>>
    tpu.enqueue_dma source(%21 : memref<1x32xf32, #tpu.memory_space<any>>) target(%22 : memref<1x32xf32, #tpu.memory_space<vmem>>) target_semaphore(%24 : memref<!tpu.dma_semaphore, #tpu.memory_space<semaphore_mem>>)
    %c5 = arith.constant 5 : index
    %25 = memref.load %arg0[%c5] : memref<16xi32, #tpu.memory_space<smem>>
    %c5_i32 = arith.constant 5 : i32
    %c0_i32_15 = arith.constant 0 : i32
    %26 = tpu.memref_slice %arg2[%25, %c0_i32_15] : memref<300x32xf32, #tpu.memory_space<any>> -> memref<1x32xf32, #tpu.memory_space<any>>
    %c5_i32_16 = arith.constant 5 : i32
    %c0_i32_17 = arith.constant 0 : i32
    %27 = tpu.memref_slice %arg4[%c5_i32_16, %c0_i32_17] : memref<16x32xf32, #tpu.memory_space<vmem>> -> memref<1x32xf32, #tpu.memory_space<vmem>>
    %28 = tpu.memref_slice %arg5[%c5_i32] : memref<16x!tpu.dma_semaphore, #tpu.memory_space<semaphore_mem>> -> memref<1x!tpu.dma_semaphore, #tpu.memory_space<semaphore_mem>>
    %29 = tpu.memref_squeeze %28 : memref<1x!tpu.dma_semaphore, #tpu.memory_space<semaphore_mem>> -> memref<!tpu.dma_semaphore, #tpu.memory_space<semaphore_mem>>
    tpu.enqueue_dma source(%26 : memref<1x32xf32, #tpu.memory_space<any>>) target(%27 : memref<1x32xf32, #tpu.memory_space<vmem>>) target_semaphore(%29 : memref<!tpu.dma_semaphore, #tpu.memory_space<semaphore_mem>>)
    %c6 = arith.constant 6 : index
    %30 = memref.load %arg0[%c6] : memref<16xi32, #tpu.memory_space<smem>>
    %c6_i32 = arith.constant 6 : i32
    %c0_i32_18 = arith.constant 0 : i32
    %31 = tpu.memref_slice %arg2[%30, %c0_i32_18] : memref<300x32xf32, #tpu.memory_space<any>> -> memref<1x32xf32, #tpu.memory_space<any>>
    %c6_i32_19 = arith.constant 6 : i32
    %c0_i32_20 = arith.constant 0 : i32
    %32 = tpu.memref_slice %arg4[%c6_i32_19, %c0_i32_20] : memref<16x32xf32, #tpu.memory_space<vmem>> -> memref<1x32xf32, #tpu.memory_space<vmem>>
    %33 = tpu.memref_slice %arg5[%c6_i32] : memref<16x!tpu.dma_semaphore, #tpu.memory_space<semaphore_mem>> -> memref<1x!tpu.dma_semaphore, #tpu.memory_space<semaphore_mem>>
    %34 = tpu.memref_squeeze %33 : memref<1x!tpu.dma_semaphore, #tpu.memory_space<semaphore_mem>> -> memref<!tpu.dma_semaphore, #tpu.memory_space<semaphore_mem>>
    tpu.enqueue_dma source(%31 : memref<1x32xf32, #tpu.memory_space<any>>) target(%32 : memref<1x32xf32, #tpu.memory_space<vmem>>) target_semaphore(%34 : memref<!tpu.dma_semaphore, #tpu.memory_space<semaphore_mem>>)
    %c7 = arith.constant 7 : index
    %35 = memref.load %arg0[%c7] : memref<16xi32, #tpu.memory_space<smem>>
    %c7_i32 = arith.constant 7 : i32
    %c0_i32_21 = arith.constant 0 : i32
    %36 = tpu.memref_slice %arg2[%35, %c0_i32_21] : memref<300x32xf32, #tpu.memory_space<any>> -> memref<1x32xf32, #tpu.memory_space<any>>
    %c7_i32_22 = arith.constant 7 : i32
    %c0_i32_23 = arith.constant 0 : i32
    %37 = tpu.memref_slice %arg4[%c7_i32_22, %c0_i32_23] : memref<16x32xf32, #tpu.memory_space<vmem>> -> memref<1x32xf32, #tpu.memory_space<vmem>>
    %38 = tpu.memref_slice %arg5[%c7_i32] : memref<16x!tpu.dma_semaphore, #tpu.memory_space<semaphore_mem>> -> memref<1x!tpu.dma_semaphore, #tpu.memory_space<semaphore_mem>>
    %39 = tpu.memref_squeeze %38 : memref<1x!tpu.dma_semaphore, #tpu.memory_space<semaphore_mem>> -> memref<!tpu.dma_semaphore, #tpu.memory_space<semaphore_mem>>
    tpu.enqueue_dma source(%36 : memref<1x32xf32, #tpu.memory_space<any>>) target(%37 : memref<1x32xf32, #tpu.memory_space<vmem>>) target_semaphore(%39 : memref<!tpu.dma_semaphore, #tpu.memory_space<semaphore_mem>>)
    %c8 = arith.constant 8 : index
    %40 = memref.load %arg0[%c8] : memref<16xi32, #tpu.memory_space<smem>>
    %c8_i32 = arith.constant 8 : i32
    %c0_i32_24 = arith.constant 0 : i32
    %41 = tpu.memref_slice %arg2[%40, %c0_i32_24] : memref<300x32xf32, #tpu.memory_space<any>> -> memref<1x32xf32, #tpu.memory_space<any>>
    %c8_i32_25 = arith.constant 8 : i32
    %c0_i32_26 = arith.constant 0 : i32
    %42 = tpu.memref_slice %arg4[%c8_i32_25, %c0_i32_26] : memref<16x32xf32, #tpu.memory_space<vmem>> -> memref<1x32xf32, #tpu.memory_space<vmem>>
    %43 = tpu.memref_slice %arg5[%c8_i32] : memref<16x!tpu.dma_semaphore, #tpu.memory_space<semaphore_mem>> -> memref<1x!tpu.dma_semaphore, #tpu.memory_space<semaphore_mem>>
    %44 = tpu.memref_squeeze %43 : memref<1x!tpu.dma_semaphore, #tpu.memory_space<semaphore_mem>> -> memref<!tpu.dma_semaphore, #tpu.memory_space<semaphore_mem>>
    tpu.enqueue_dma source(%41 : memref<1x32xf32, #tpu.memory_space<any>>) target(%42 : memref<1x32xf32, #tpu.memory_space<vmem>>) target_semaphore(%44 : memref<!tpu.dma_semaphore, #tpu.memory_space<semaphore_mem>>)
    %c9 = arith.constant 9 : index
    %45 = memref.load %arg0[%c9] : memref<16xi32, #tpu.memory_space<smem>>
    %c9_i32 = arith.constant 9 : i32
    %c0_i32_27 = arith.constant 0 : i32
    %46 = tpu.memref_slice %arg2[%45, %c0_i32_27] : memref<300x32xf32, #tpu.memory_space<any>> -> memref<1x32xf32, #tpu.memory_space<any>>
    %c9_i32_28 = arith.constant 9 : i32
    %c0_i32_29 = arith.constant 0 : i32
    %47 = tpu.memref_slice %arg4[%c9_i32_28, %c0_i32_29] : memref<16x32xf32, #tpu.memory_space<vmem>> -> memref<1x32xf32, #tpu.memory_space<vmem>>
    %48 = tpu.memref_slice %arg5[%c9_i32] : memref<16x!tpu.dma_semaphore, #tpu.memory_space<semaphore_mem>> -> memref<1x!tpu.dma_semaphore, #tpu.memory_space<semaphore_mem>>
    %49 = tpu.memref_squeeze %48 : memref<1x!tpu.dma_semaphore, #tpu.memory_space<semaphore_mem>> -> memref<!tpu.dma_semaphore, #tpu.memory_space<semaphore_mem>>
    tpu.enqueue_dma source(%46 : memref<1x32xf32, #tpu.memory_space<any>>) target(%47 : memref<1x32xf32, #tpu.memory_space<vmem>>) target_semaphore(%49 : memref<!tpu.dma_semaphore, #tpu.memory_space<semaphore_mem>>)
    %c10 = arith.constant 10 : index
    %50 = memref.load %arg0[%c10] : memref<16xi32, #tpu.memory_space<smem>>
    %c10_i32 = arith.constant 10 : i32
    %c0_i32_30 = arith.constant 0 : i32
    %51 = tpu.memref_slice %arg2[%50, %c0_i32_30] : memref<300x32xf32, #tpu.memory_space<any>> -> memref<1x32xf32, #tpu.memory_space<any>>
    %c10_i32_31 = arith.constant 10 : i32
    %c0_i32_32 = arith.constant 0 : i32
    %52 = tpu.memref_slice %arg4[%c10_i32_31, %c0_i32_32] : memref<16x32xf32, #tpu.memory_space<vmem>> -> memref<1x32xf32, #tpu.memory_space<vmem>>
    %53 = tpu.memref_slice %arg5[%c10_i32] : memref<16x!tpu.dma_semaphore, #tpu.memory_space<semaphore_mem>> -> memref<1x!tpu.dma_semaphore, #tpu.memory_space<semaphore_mem>>
    %54 = tpu.memref_squeeze %53 : memref<1x!tpu.dma_semaphore, #tpu.memory_space<semaphore_mem>> -> memref<!tpu.dma_semaphore, #tpu.memory_space<semaphore_mem>>
    tpu.enqueue_dma source(%51 : memref<1x32xf32, #tpu.memory_space<any>>) target(%52 : memref<1x32xf32, #tpu.memory_space<vmem>>) target_semaphore(%54 : memref<!tpu.dma_semaphore, #tpu.memory_space<semaphore_mem>>)
    %c11 = arith.constant 11 : index
    %55 = memref.load %arg0[%c11] : memref<16xi32, #tpu.memory_space<smem>>
    %c11_i32 = arith.constant 11 : i32
    %c0_i32_33 = arith.constant 0 : i32
    %56 = tpu.memref_slice %arg2[%55, %c0_i32_33] : memref<300x32xf32, #tpu.memory_space<any>> -> memref<1x32xf32, #tpu.memory_space<any>>
    %c11_i32_34 = arith.constant 11 : i32
    %c0_i32_35 = arith.constant 0 : i32
    %57 = tpu.memref_slice %arg4[%c11_i32_34, %c0_i32_35] : memref<16x32xf32, #tpu.memory_space<vmem>> -> memref<1x32xf32, #tpu.memory_space<vmem>>
    %58 = tpu.memref_slice %arg5[%c11_i32] : memref<16x!tpu.dma_semaphore, #tpu.memory_space<semaphore_mem>> -> memref<1x!tpu.dma_semaphore, #tpu.memory_space<semaphore_mem>>
    %59 = tpu.memref_squeeze %58 : memref<1x!tpu.dma_semaphore, #tpu.memory_space<semaphore_mem>> -> memref<!tpu.dma_semaphore, #tpu.memory_space<semaphore_mem>>
    tpu.enqueue_dma source(%56 : memref<1x32xf32, #tpu.memory_space<any>>) target(%57 : memref<1x32xf32, #tpu.memory_space<vmem>>) target_semaphore(%59 : memref<!tpu.dma_semaphore, #tpu.memory_space<semaphore_mem>>)
    %c12 = arith.constant 12 : index
    %60 = memref.load %arg0[%c12] : memref<16xi32, #tpu.memory_space<smem>>
    %c12_i32 = arith.constant 12 : i32
    %c0_i32_36 = arith.constant 0 : i32
    %61 = tpu.memref_slice %arg2[%60, %c0_i32_36] : memref<300x32xf32, #tpu.memory_space<any>> -> memref<1x32xf32, #tpu.memory_space<any>>
    %c12_i32_37 = arith.constant 12 : i32
    %c0_i32_38 = arith.constant 0 : i32
    %62 = tpu.memref_slice %arg4[%c12_i32_37, %c0_i32_38] : memref<16x32xf32, #tpu.memory_space<vmem>> -> memref<1x32xf32, #tpu.memory_space<vmem>>
    %63 = tpu.memref_slice %arg5[%c12_i32] : memref<16x!tpu.dma_semaphore, #tpu.memory_space<semaphore_mem>> -> memref<1x!tpu.dma_semaphore, #tpu.memory_space<semaphore_mem>>
    %64 = tpu.memref_squeeze %63 : memref<1x!tpu.dma_semaphore, #tpu.memory_space<semaphore_mem>> -> memref<!tpu.dma_semaphore, #tpu.memory_space<semaphore_mem>>
    tpu.enqueue_dma source(%61 : memref<1x32xf32, #tpu.memory_space<any>>) target(%62 : memref<1x32xf32, #tpu.memory_space<vmem>>) target_semaphore(%64 : memref<!tpu.dma_semaphore, #tpu.memory_space<semaphore_mem>>)
    %c13 = arith.constant 13 : index
    %65 = memref.load %arg0[%c13] : memref<16xi32, #tpu.memory_space<smem>>
    %c13_i32 = arith.constant 13 : i32
    %c0_i32_39 = arith.constant 0 : i32
    %66 = tpu.memref_slice %arg2[%65, %c0_i32_39] : memref<300x32xf32, #tpu.memory_space<any>> -> memref<1x32xf32, #tpu.memory_space<any>>
    %c13_i32_40 = arith.constant 13 : i32
    %c0_i32_41 = arith.constant 0 : i32
    %67 = tpu.memref_slice %arg4[%c13_i32_40, %c0_i32_41] : memref<16x32xf32, #tpu.memory_space<vmem>> -> memref<1x32xf32, #tpu.memory_space<vmem>>
    %68 = tpu.memref_slice %arg5[%c13_i32] : memref<16x!tpu.dma_semaphore, #tpu.memory_space<semaphore_mem>> -> memref<1x!tpu.dma_semaphore, #tpu.memory_space<semaphore_mem>>
    %69 = tpu.memref_squeeze %68 : memref<1x!tpu.dma_semaphore, #tpu.memory_space<semaphore_mem>> -> memref<!tpu.dma_semaphore, #tpu.memory_space<semaphore_mem>>
    tpu.enqueue_dma source(%66 : memref<1x32xf32, #tpu.memory_space<any>>) target(%67 : memref<1x32xf32, #tpu.memory_space<vmem>>) target_semaphore(%69 : memref<!tpu.dma_semaphore, #tpu.memory_space<semaphore_mem>>)
    %c14 = arith.constant 14 : index
    %70 = memref.load %arg0[%c14] : memref<16xi32, #tpu.memory_space<smem>>
    %c14_i32 = arith.constant 14 : i32
    %c0_i32_42 = arith.constant 0 : i32
    %71 = tpu.memref_slice %arg2[%70, %c0_i32_42] : memref<300x32xf32, #tpu.memory_space<any>> -> memref<1x32xf32, #tpu.memory_space<any>>
    %c14_i32_43 = arith.constant 14 : i32
    %c0_i32_44 = arith.constant 0 : i32
    %72 = tpu.memref_slice %arg4[%c14_i32_43, %c0_i32_44] : memref<16x32xf32, #tpu.memory_space<vmem>> -> memref<1x32xf32, #tpu.memory_space<vmem>>
    %73 = tpu.memref_slice %arg5[%c14_i32] : memref<16x!tpu.dma_semaphore, #tpu.memory_space<semaphore_mem>> -> memref<1x!tpu.dma_semaphore, #tpu.memory_space<semaphore_mem>>
    %74 = tpu.memref_squeeze %73 : memref<1x!tpu.dma_semaphore, #tpu.memory_space<semaphore_mem>> -> memref<!tpu.dma_semaphore, #tpu.memory_space<semaphore_mem>>
    tpu.enqueue_dma source(%71 : memref<1x32xf32, #tpu.memory_space<any>>) target(%72 : memref<1x32xf32, #tpu.memory_space<vmem>>) target_semaphore(%74 : memref<!tpu.dma_semaphore, #tpu.memory_space<semaphore_mem>>)
    %c15 = arith.constant 15 : index
    %75 = memref.load %arg0[%c15] : memref<16xi32, #tpu.memory_space<smem>>
    %c15_i32 = arith.constant 15 : i32
    %c0_i32_45 = arith.constant 0 : i32
    %76 = tpu.memref_slice %arg2[%75, %c0_i32_45] : memref<300x32xf32, #tpu.memory_space<any>> -> memref<1x32xf32, #tpu.memory_space<any>>
    %c15_i32_46 = arith.constant 15 : i32
    %c0_i32_47 = arith.constant 0 : i32
    %77 = tpu.memref_slice %arg4[%c15_i32_46, %c0_i32_47] : memref<16x32xf32, #tpu.memory_space<vmem>> -> memref<1x32xf32, #tpu.memory_space<vmem>>
    %78 = tpu.memref_slice %arg5[%c15_i32] : memref<16x!tpu.dma_semaphore, #tpu.memory_space<semaphore_mem>> -> memref<1x!tpu.dma_semaphore, #tpu.memory_space<semaphore_mem>>
    %79 = tpu.memref_squeeze %78 : memref<1x!tpu.dma_semaphore, #tpu.memory_space<semaphore_mem>> -> memref<!tpu.dma_semaphore, #tpu.memory_space<semaphore_mem>>
    tpu.enqueue_dma source(%76 : memref<1x32xf32, #tpu.memory_space<any>>) target(%77 : memref<1x32xf32, #tpu.memory_space<vmem>>) target_semaphore(%79 : memref<!tpu.dma_semaphore, #tpu.memory_space<semaphore_mem>>)
    %c0_i32_48 = arith.constant 0 : i32
    %c0_i32_49 = arith.constant 0 : i32
    %80 = tpu.memref_slice %arg2[%0, %c0_i32_49] : memref<300x32xf32, #tpu.memory_space<any>> -> memref<1x32xf32, #tpu.memory_space<any>>
    %c0_i32_50 = arith.constant 0 : i32
    %c0_i32_51 = arith.constant 0 : i32
    %81 = tpu.memref_slice %arg4[%c0_i32_50, %c0_i32_51] : memref<16x32xf32, #tpu.memory_space<vmem>> -> memref<1x32xf32, #tpu.memory_space<vmem>>
    %82 = tpu.memref_slice %arg5[%c0_i32_48] : memref<16x!tpu.dma_semaphore, #tpu.memory_space<semaphore_mem>> -> memref<1x!tpu.dma_semaphore, #tpu.memory_space<semaphore_mem>>
    %83 = tpu.memref_squeeze %82 : memref<1x!tpu.dma_semaphore, #tpu.memory_space<semaphore_mem>> -> memref<!tpu.dma_semaphore, #tpu.memory_space<semaphore_mem>>
    tpu.wait_dma2 semaphore(%83 : memref<!tpu.dma_semaphore, #tpu.memory_space<semaphore_mem>>) src(%80 : memref<1x32xf32, #tpu.memory_space<any>>) dst(%81 : memref<1x32xf32, #tpu.memory_space<vmem>>)
    %c1_i32_52 = arith.constant 1 : i32
    %c0_i32_53 = arith.constant 0 : i32
    %84 = tpu.memref_slice %arg2[%5, %c0_i32_53] : memref<300x32xf32, #tpu.memory_space<any>> -> memref<1x32xf32, #tpu.memory_space<any>>
    %c1_i32_54 = arith.constant 1 : i32
    %c0_i32_55 = arith.constant 0 : i32
    %85 = tpu.memref_slice %arg4[%c1_i32_54, %c0_i32_55] : memref<16x32xf32, #tpu.memory_space<vmem>> -> memref<1x32xf32, #tpu.memory_space<vmem>>
    %86 = tpu.memref_slice %arg5[%c1_i32_52] : memref<16x!tpu.dma_semaphore, #tpu.memory_space<semaphore_mem>> -> memref<1x!tpu.dma_semaphore, #tpu.memory_space<semaphore_mem>>
    %87 = tpu.memref_squeeze %86 : memref<1x!tpu.dma_semaphore, #tpu.memory_space<semaphore_mem>> -> memref<!tpu.dma_semaphore, #tpu.memory_space<semaphore_mem>>
    tpu.wait_dma2 semaphore(%87 : memref<!tpu.dma_semaphore, #tpu.memory_space<semaphore_mem>>) src(%84 : memref<1x32xf32, #tpu.memory_space<any>>) dst(%85 : memref<1x32xf32, #tpu.memory_space<vmem>>)
    %c2_i32_56 = arith.constant 2 : i32
    %c0_i32_57 = arith.constant 0 : i32
    %88 = tpu.memref_slice %arg2[%10, %c0_i32_57] : memref<300x32xf32, #tpu.memory_space<any>> -> memref<1x32xf32, #tpu.memory_space<any>>
    %c2_i32_58 = arith.constant 2 : i32
    %c0_i32_59 = arith.constant 0 : i32
    %89 = tpu.memref_slice %arg4[%c2_i32_58, %c0_i32_59] : memref<16x32xf32, #tpu.memory_space<vmem>> -> memref<1x32xf32, #tpu.memory_space<vmem>>
    %90 = tpu.memref_slice %arg5[%c2_i32_56] : memref<16x!tpu.dma_semaphore, #tpu.memory_space<semaphore_mem>> -> memref<1x!tpu.dma_semaphore, #tpu.memory_space<semaphore_mem>>
    %91 = tpu.memref_squeeze %90 : memref<1x!tpu.dma_semaphore, #tpu.memory_space<semaphore_mem>> -> memref<!tpu.dma_semaphore, #tpu.memory_space<semaphore_mem>>
    tpu.wait_dma2 semaphore(%91 : memref<!tpu.dma_semaphore, #tpu.memory_space<semaphore_mem>>) src(%88 : memref<1x32xf32, #tpu.memory_space<any>>) dst(%89 : memref<1x32xf32, #tpu.memory_space<vmem>>)
    %c3_i32_60 = arith.constant 3 : i32
    %c0_i32_61 = arith.constant 0 : i32
    %92 = tpu.memref_slice %arg2[%15, %c0_i32_61] : memref<300x32xf32, #tpu.memory_space<any>> -> memref<1x32xf32, #tpu.memory_space<any>>
    %c3_i32_62 = arith.constant 3 : i32
    %c0_i32_63 = arith.constant 0 : i32
    %93 = tpu.memref_slice %arg4[%c3_i32_62, %c0_i32_63] : memref<16x32xf32, #tpu.memory_space<vmem>> -> memref<1x32xf32, #tpu.memory_space<vmem>>
    %94 = tpu.memref_slice %arg5[%c3_i32_60] : memref<16x!tpu.dma_semaphore, #tpu.memory_space<semaphore_mem>> -> memref<1x!tpu.dma_semaphore, #tpu.memory_space<semaphore_mem>>
    %95 = tpu.memref_squeeze %94 : memref<1x!tpu.dma_semaphore, #tpu.memory_space<semaphore_mem>> -> memref<!tpu.dma_semaphore, #tpu.memory_space<semaphore_mem>>
    tpu.wait_dma2 semaphore(%95 : memref<!tpu.dma_semaphore, #tpu.memory_space<semaphore_mem>>) src(%92 : memref<1x32xf32, #tpu.memory_space<any>>) dst(%93 : memref<1x32xf32, #tpu.memory_space<vmem>>)
    %c4_i32_64 = arith.constant 4 : i32
    %c0_i32_65 = arith.constant 0 : i32
    %96 = tpu.memref_slice %arg2[%20, %c0_i32_65] : memref<300x32xf32, #tpu.memory_space<any>> -> memref<1x32xf32, #tpu.memory_space<any>>
    %c4_i32_66 = arith.constant 4 : i32
    %c0_i32_67 = arith.constant 0 : i32
    %97 = tpu.memref_slice %arg4[%c4_i32_66, %c0_i32_67] : memref<16x32xf32, #tpu.memory_space<vmem>> -> memref<1x32xf32, #tpu.memory_space<vmem>>
    %98 = tpu.memref_slice %arg5[%c4_i32_64] : memref<16x!tpu.dma_semaphore, #tpu.memory_space<semaphore_mem>> -> memref<1x!tpu.dma_semaphore, #tpu.memory_space<semaphore_mem>>
    %99 = tpu.memref_squeeze %98 : memref<1x!tpu.dma_semaphore, #tpu.memory_space<semaphore_mem>> -> memref<!tpu.dma_semaphore, #tpu.memory_space<semaphore_mem>>
    tpu.wait_dma2 semaphore(%99 : memref<!tpu.dma_semaphore, #tpu.memory_space<semaphore_mem>>) src(%96 : memref<1x32xf32, #tpu.memory_space<any>>) dst(%97 : memref<1x32xf32, #tpu.memory_space<vmem>>)
    %c5_i32_68 = arith.constant 5 : i32
    %c0_i32_69 = arith.constant 0 : i32
    %100 = tpu.memref_slice %arg2[%25, %c0_i32_69] : memref<300x32xf32, #tpu.memory_space<any>> -> memref<1x32xf32, #tpu.memory_space<any>>
    %c5_i32_70 = arith.constant 5 : i32
    %c0_i32_71 = arith.constant 0 : i32
    %101 = tpu.memref_slice %arg4[%c5_i32_70, %c0_i32_71] : memref<16x32xf32, #tpu.memory_space<vmem>> -> memref<1x32xf32, #tpu.memory_space<vmem>>
    %102 = tpu.memref_slice %arg5[%c5_i32_68] : memref<16x!tpu.dma_semaphore, #tpu.memory_space<semaphore_mem>> -> memref<1x!tpu.dma_semaphore, #tpu.memory_space<semaphore_mem>>
    %103 = tpu.memref_squeeze %102 : memref<1x!tpu.dma_semaphore, #tpu.memory_space<semaphore_mem>> -> memref<!tpu.dma_semaphore, #tpu.memory_space<semaphore_mem>>
    tpu.wait_dma2 semaphore(%103 : memref<!tpu.dma_semaphore, #tpu.memory_space<semaphore_mem>>) src(%100 : memref<1x32xf32, #tpu.memory_space<any>>) dst(%101 : memref<1x32xf32, #tpu.memory_space<vmem>>)
    %c6_i32_72 = arith.constant 6 : i32
    %c0_i32_73 = arith.constant 0 : i32
    %104 = tpu.memref_slice %arg2[%30, %c0_i32_73] : memref<300x32xf32, #tpu.memory_space<any>> -> memref<1x32xf32, #tpu.memory_space<any>>
    %c6_i32_74 = arith.constant 6 : i32
    %c0_i32_75 = arith.constant 0 : i32
    %105 = tpu.memref_slice %arg4[%c6_i32_74, %c0_i32_75] : memref<16x32xf32, #tpu.memory_space<vmem>> -> memref<1x32xf32, #tpu.memory_space<vmem>>
    %106 = tpu.memref_slice %arg5[%c6_i32_72] : memref<16x!tpu.dma_semaphore, #tpu.memory_space<semaphore_mem>> -> memref<1x!tpu.dma_semaphore, #tpu.memory_space<semaphore_mem>>
    %107 = tpu.memref_squeeze %106 : memref<1x!tpu.dma_semaphore, #tpu.memory_space<semaphore_mem>> -> memref<!tpu.dma_semaphore, #tpu.memory_space<semaphore_mem>>
    tpu.wait_dma2 semaphore(%107 : memref<!tpu.dma_semaphore, #tpu.memory_space<semaphore_mem>>) src(%104 : memref<1x32xf32, #tpu.memory_space<any>>) dst(%105 : memref<1x32xf32, #tpu.memory_space<vmem>>)
    %c7_i32_76 = arith.constant 7 : i32
    %c0_i32_77 = arith.constant 0 : i32
    %108 = tpu.memref_slice %arg2[%35, %c0_i32_77] : memref<300x32xf32, #tpu.memory_space<any>> -> memref<1x32xf32, #tpu.memory_space<any>>
    %c7_i32_78 = arith.constant 7 : i32
    %c0_i32_79 = arith.constant 0 : i32
    %109 = tpu.memref_slice %arg4[%c7_i32_78, %c0_i32_79] : memref<16x32xf32, #tpu.memory_space<vmem>> -> memref<1x32xf32, #tpu.memory_space<vmem>>
    %110 = tpu.memref_slice %arg5[%c7_i32_76] : memref<16x!tpu.dma_semaphore, #tpu.memory_space<semaphore_mem>> -> memref<1x!tpu.dma_semaphore, #tpu.memory_space<semaphore_mem>>
    %111 = tpu.memref_squeeze %110 : memref<1x!tpu.dma_semaphore, #tpu.memory_space<semaphore_mem>> -> memref<!tpu.dma_semaphore, #tpu.memory_space<semaphore_mem>>
    tpu.wait_dma2 semaphore(%111 : memref<!tpu.dma_semaphore, #tpu.memory_space<semaphore_mem>>) src(%108 : memref<1x32xf32, #tpu.memory_space<any>>) dst(%109 : memref<1x32xf32, #tpu.memory_space<vmem>>)
    %c8_i32_80 = arith.constant 8 : i32
    %c0_i32_81 = arith.constant 0 : i32
    %112 = tpu.memref_slice %arg2[%40, %c0_i32_81] : memref<300x32xf32, #tpu.memory_space<any>> -> memref<1x32xf32, #tpu.memory_space<any>>
    %c8_i32_82 = arith.constant 8 : i32
    %c0_i32_83 = arith.constant 0 : i32
    %113 = tpu.memref_slice %arg4[%c8_i32_82, %c0_i32_83] : memref<16x32xf32, #tpu.memory_space<vmem>> -> memref<1x32xf32, #tpu.memory_space<vmem>>
    %114 = tpu.memref_slice %arg5[%c8_i32_80] : memref<16x!tpu.dma_semaphore, #tpu.memory_space<semaphore_mem>> -> memref<1x!tpu.dma_semaphore, #tpu.memory_space<semaphore_mem>>
    %115 = tpu.memref_squeeze %114 : memref<1x!tpu.dma_semaphore, #tpu.memory_space<semaphore_mem>> -> memref<!tpu.dma_semaphore, #tpu.memory_space<semaphore_mem>>
    tpu.wait_dma2 semaphore(%115 : memref<!tpu.dma_semaphore, #tpu.memory_space<semaphore_mem>>) src(%112 : memref<1x32xf32, #tpu.memory_space<any>>) dst(%113 : memref<1x32xf32, #tpu.memory_space<vmem>>)
    %c9_i32_84 = arith.constant 9 : i32
    %c0_i32_85 = arith.constant 0 : i32
    %116 = tpu.memref_slice %arg2[%45, %c0_i32_85] : memref<300x32xf32, #tpu.memory_space<any>> -> memref<1x32xf32, #tpu.memory_space<any>>
    %c9_i32_86 = arith.constant 9 : i32
    %c0_i32_87 = arith.constant 0 : i32
    %117 = tpu.memref_slice %arg4[%c9_i32_86, %c0_i32_87] : memref<16x32xf32, #tpu.memory_space<vmem>> -> memref<1x32xf32, #tpu.memory_space<vmem>>
    %118 = tpu.memref_slice %arg5[%c9_i32_84] : memref<16x!tpu.dma_semaphore, #tpu.memory_space<semaphore_mem>> -> memref<1x!tpu.dma_semaphore, #tpu.memory_space<semaphore_mem>>
    %119 = tpu.memref_squeeze %118 : memref<1x!tpu.dma_semaphore, #tpu.memory_space<semaphore_mem>> -> memref<!tpu.dma_semaphore, #tpu.memory_space<semaphore_mem>>
    tpu.wait_dma2 semaphore(%119 : memref<!tpu.dma_semaphore, #tpu.memory_space<semaphore_mem>>) src(%116 : memref<1x32xf32, #tpu.memory_space<any>>) dst(%117 : memref<1x32xf32, #tpu.memory_space<vmem>>)
    %c10_i32_88 = arith.constant 10 : i32
    %c0_i32_89 = arith.constant 0 : i32
    %120 = tpu.memref_slice %arg2[%50, %c0_i32_89] : memref<300x32xf32, #tpu.memory_space<any>> -> memref<1x32xf32, #tpu.memory_space<any>>
    %c10_i32_90 = arith.constant 10 : i32
    %c0_i32_91 = arith.constant 0 : i32
    %121 = tpu.memref_slice %arg4[%c10_i32_90, %c0_i32_91] : memref<16x32xf32, #tpu.memory_space<vmem>> -> memref<1x32xf32, #tpu.memory_space<vmem>>
    %122 = tpu.memref_slice %arg5[%c10_i32_88] : memref<16x!tpu.dma_semaphore, #tpu.memory_space<semaphore_mem>> -> memref<1x!tpu.dma_semaphore, #tpu.memory_space<semaphore_mem>>
    %123 = tpu.memref_squeeze %122 : memref<1x!tpu.dma_semaphore, #tpu.memory_space<semaphore_mem>> -> memref<!tpu.dma_semaphore, #tpu.memory_space<semaphore_mem>>
    tpu.wait_dma2 semaphore(%123 : memref<!tpu.dma_semaphore, #tpu.memory_space<semaphore_mem>>) src(%120 : memref<1x32xf32, #tpu.memory_space<any>>) dst(%121 : memref<1x32xf32, #tpu.memory_space<vmem>>)
    %c11_i32_92 = arith.constant 11 : i32
    %c0_i32_93 = arith.constant 0 : i32
    %124 = tpu.memref_slice %arg2[%55, %c0_i32_93] : memref<300x32xf32, #tpu.memory_space<any>> -> memref<1x32xf32, #tpu.memory_space<any>>
    %c11_i32_94 = arith.constant 11 : i32
    %c0_i32_95 = arith.constant 0 : i32
    %125 = tpu.memref_slice %arg4[%c11_i32_94, %c0_i32_95] : memref<16x32xf32, #tpu.memory_space<vmem>> -> memref<1x32xf32, #tpu.memory_space<vmem>>
    %126 = tpu.memref_slice %arg5[%c11_i32_92] : memref<16x!tpu.dma_semaphore, #tpu.memory_space<semaphore_mem>> -> memref<1x!tpu.dma_semaphore, #tpu.memory_space<semaphore_mem>>
    %127 = tpu.memref_squeeze %126 : memref<1x!tpu.dma_semaphore, #tpu.memory_space<semaphore_mem>> -> memref<!tpu.dma_semaphore, #tpu.memory_space<semaphore_mem>>
    tpu.wait_dma2 semaphore(%127 : memref<!tpu.dma_semaphore, #tpu.memory_space<semaphore_mem>>) src(%124 : memref<1x32xf32, #tpu.memory_space<any>>) dst(%125 : memref<1x32xf32, #tpu.memory_space<vmem>>)
    %c12_i32_96 = arith.constant 12 : i32
    %c0_i32_97 = arith.constant 0 : i32
    %128 = tpu.memref_slice %arg2[%60, %c0_i32_97] : memref<300x32xf32, #tpu.memory_space<any>> -> memref<1x32xf32, #tpu.memory_space<any>>
    %c12_i32_98 = arith.constant 12 : i32
    %c0_i32_99 = arith.constant 0 : i32
    %129 = tpu.memref_slice %arg4[%c12_i32_98, %c0_i32_99] : memref<16x32xf32, #tpu.memory_space<vmem>> -> memref<1x32xf32, #tpu.memory_space<vmem>>
    %130 = tpu.memref_slice %arg5[%c12_i32_96] : memref<16x!tpu.dma_semaphore, #tpu.memory_space<semaphore_mem>> -> memref<1x!tpu.dma_semaphore, #tpu.memory_space<semaphore_mem>>
    %131 = tpu.memref_squeeze %130 : memref<1x!tpu.dma_semaphore, #tpu.memory_space<semaphore_mem>> -> memref<!tpu.dma_semaphore, #tpu.memory_space<semaphore_mem>>
    tpu.wait_dma2 semaphore(%131 : memref<!tpu.dma_semaphore, #tpu.memory_space<semaphore_mem>>) src(%128 : memref<1x32xf32, #tpu.memory_space<any>>) dst(%129 : memref<1x32xf32, #tpu.memory_space<vmem>>)
    %c13_i32_100 = arith.constant 13 : i32
    %c0_i32_101 = arith.constant 0 : i32
    %132 = tpu.memref_slice %arg2[%65, %c0_i32_101] : memref<300x32xf32, #tpu.memory_space<any>> -> memref<1x32xf32, #tpu.memory_space<any>>
    %c13_i32_102 = arith.constant 13 : i32
    %c0_i32_103 = arith.constant 0 : i32
    %133 = tpu.memref_slice %arg4[%c13_i32_102, %c0_i32_103] : memref<16x32xf32, #tpu.memory_space<vmem>> -> memref<1x32xf32, #tpu.memory_space<vmem>>
    %134 = tpu.memref_slice %arg5[%c13_i32_100] : memref<16x!tpu.dma_semaphore, #tpu.memory_space<semaphore_mem>> -> memref<1x!tpu.dma_semaphore, #tpu.memory_space<semaphore_mem>>
    %135 = tpu.memref_squeeze %134 : memref<1x!tpu.dma_semaphore, #tpu.memory_space<semaphore_mem>> -> memref<!tpu.dma_semaphore, #tpu.memory_space<semaphore_mem>>
    tpu.wait_dma2 semaphore(%135 : memref<!tpu.dma_semaphore, #tpu.memory_space<semaphore_mem>>) src(%132 : memref<1x32xf32, #tpu.memory_space<any>>) dst(%133 : memref<1x32xf32, #tpu.memory_space<vmem>>)
    %c14_i32_104 = arith.constant 14 : i32
    %c0_i32_105 = arith.constant 0 : i32
    %136 = tpu.memref_slice %arg2[%70, %c0_i32_105] : memref<300x32xf32, #tpu.memory_space<any>> -> memref<1x32xf32, #tpu.memory_space<any>>
    %c14_i32_106 = arith.constant 14 : i32
    %c0_i32_107 = arith.constant 0 : i32
    %137 = tpu.memref_slice %arg4[%c14_i32_106, %c0_i32_107] : memref<16x32xf32, #tpu.memory_space<vmem>> -> memref<1x32xf32, #tpu.memory_space<vmem>>
    %138 = tpu.memref_slice %arg5[%c14_i32_104] : memref<16x!tpu.dma_semaphore, #tpu.memory_space<semaphore_mem>> -> memref<1x!tpu.dma_semaphore, #tpu.memory_space<semaphore_mem>>
    %139 = tpu.memref_squeeze %138 : memref<1x!tpu.dma_semaphore, #tpu.memory_space<semaphore_mem>> -> memref<!tpu.dma_semaphore, #tpu.memory_space<semaphore_mem>>
    tpu.wait_dma2 semaphore(%139 : memref<!tpu.dma_semaphore, #tpu.memory_space<semaphore_mem>>) src(%136 : memref<1x32xf32, #tpu.memory_space<any>>) dst(%137 : memref<1x32xf32, #tpu.memory_space<vmem>>)
    %c15_i32_108 = arith.constant 15 : i32
    %c0_i32_109 = arith.constant 0 : i32
    %140 = tpu.memref_slice %arg2[%75, %c0_i32_109] : memref<300x32xf32, #tpu.memory_space<any>> -> memref<1x32xf32, #tpu.memory_space<any>>
    %c15_i32_110 = arith.constant 15 : i32
    %c0_i32_111 = arith.constant 0 : i32
    %141 = tpu.memref_slice %arg4[%c15_i32_110, %c0_i32_111] : memref<16x32xf32, #tpu.memory_space<vmem>> -> memref<1x32xf32, #tpu.memory_space<vmem>>
    %142 = tpu.memref_slice %arg5[%c15_i32_108] : memref<16x!tpu.dma_semaphore, #tpu.memory_space<semaphore_mem>> -> memref<1x!tpu.dma_semaphore, #tpu.memory_space<semaphore_mem>>
    %143 = tpu.memref_squeeze %142 : memref<1x!tpu.dma_semaphore, #tpu.memory_space<semaphore_mem>> -> memref<!tpu.dma_semaphore, #tpu.memory_space<semaphore_mem>>
    tpu.wait_dma2 semaphore(%143 : memref<!tpu.dma_semaphore, #tpu.memory_space<semaphore_mem>>) src(%140 : memref<1x32xf32, #tpu.memory_space<any>>) dst(%141 : memref<1x32xf32, #tpu.memory_space<vmem>>)
    %c0_112 = arith.constant 0 : index
    %c0_113 = arith.constant 0 : index
    %144 = vector.load %arg4[%c0_112, %c0_113] : memref<16x32xf32, #tpu.memory_space<vmem>>, vector<16x32xf32>
    %c0_114 = arith.constant 0 : index
    %c0_115 = arith.constant 0 : index
    %145 = vector.load %arg1[%c0_114, %c0_115] : memref<1x32xf32, #tpu.memory_space<vmem>>, vector<1x32xf32>
    %146 = vector.broadcast %145 : vector<1x32xf32> to vector<16x32xf32>
    %147 = arith.addf %144, %146 : vector<16x32xf32>
    %c0_116 = arith.constant 0 : index
    %c0_117 = arith.constant 0 : index
    %148 = vector.load %arg3[%c0_116, %c0_117] : memref<16x32xf32, #tpu.memory_space<vmem>>, vector<16x32xf32>
    tpu.vector_store %arg3[%c0_116, %c0_117], %147 {strides = array<i32>} : memref<16x32xf32, #tpu.memory_space<vmem>>, vector<16x32xf32>,
    return
  }
}

</mosaic_0001>

<llo_original>
// kernel: tpu_custom_call.1
$region0: #{tpu_custom_call.1}
  #allocation0 [shape = 'u32[]', space=smem, size = 0x4, offset = 0x4, fixed_abs, tag = 'smem constant byte address 0x4 - core index']
  #allocation1 [shape = 'u32[72,128]{1,0:T(1,128)}', space=vmem, size = 0x9000, scoped, tag = 'internal scratch']
  #allocation2 [shape = 'f32[16,32]{1,0:T(8,128)}', space=vmem, size = 0x2000, scoped, tag = 'scratch operand']
  #allocation3 [shape = 's32[16]{0}', space=sflag, size = 0x40, scoped, tag = 'scratch operand']
  #allocation8 [shape = 's32[]', space=sflag, size = 0x4, offset = 0, fixed_abs, tag = 'sflag constant byte address 0x0 - dummy sync flag']
  #allocation9 [shape = 's32[]', space=sflag, size = 0x4, offset = 0, fixed_abs, tag = 'sflag constant byte address 0x0 - dummy sync flag']
  #allocation10 [shape = 's32[]', space=sflag, size = 0x4, offset = 0, fixed_abs, tag = 'sflag constant byte address 0x0 - dummy sync flag']
  #allocation11 [shape = 's32[]', space=sflag, size = 0x4, offset = 0, fixed_abs, tag = 'sflag constant byte address 0x0 - dummy sync flag']
  #allocation12 [shape = 's32[]', space=sflag, size = 0x4, offset = 0, fixed_abs, tag = 'sflag constant byte address 0x0 - dummy sync flag']
  #allocation13 [shape = 's32[]', space=sflag, size = 0x4, offset = 0, fixed_abs, tag = 'sflag constant byte address 0x0 - dummy sync flag']
  #allocation14 [shape = 's32[]', space=sflag, size = 0x4, offset = 0, fixed_abs, tag = 'sflag constant byte address 0x0 - dummy sync flag']
  #allocation15 [shape = 's32[]', space=sflag, size = 0x4, offset = 0, fixed_abs, tag = 'sflag constant byte address 0x0 - dummy sync flag']
  #allocation16 [shape = 's32[]', space=sflag, size = 0x4, offset = 0, fixed_abs, tag = 'sflag constant byte address 0x0 - dummy sync flag']
  #allocation17 [shape = 's32[]', space=sflag, size = 0x4, offset = 0, fixed_abs, tag = 'sflag constant byte address 0x0 - dummy sync flag']
  #allocation18 [shape = 's32[]', space=sflag, size = 0x4, offset = 0, fixed_abs, tag = 'sflag constant byte address 0x0 - dummy sync flag']
  #allocation19 [shape = 's32[]', space=sflag, size = 0x4, offset = 0, fixed_abs, tag = 'sflag constant byte address 0x0 - dummy sync flag']
  #allocation20 [shape = 's32[]', space=sflag, size = 0x4, offset = 0, fixed_abs, tag = 'sflag constant byte address 0x0 - dummy sync flag']
  #allocation21 [shape = 's32[]', space=sflag, size = 0x4, offset = 0, fixed_abs, tag = 'sflag constant byte address 0x0 - dummy sync flag']
  #allocation22 [shape = 's32[]', space=sflag, size = 0x4, offset = 0, fixed_abs, tag = 'sflag constant byte address 0x0 - dummy sync flag']
  #allocation23 [shape = 's32[]', space=sflag, size = 0x4, offset = 0, fixed_abs, tag = 'sflag constant byte address 0x0 - dummy sync flag']
  %s0 = inlined_call_operand.vmem [shape: s32[16], index: 0, kind: input, shape index: {}]
  %s1 = inlined_call_operand.vmem [shape: f32[1,32], index: 1, kind: input, shape index: {}]
  %s2 = inlined_call_operand.vmem [shape: f32[300,32], index: 2, kind: input, shape index: {}]
  %s3 = inlined_call_operand.hbm [shape: f32[16,32], index: 3, kind: output, shape index: {}]
  %s4 = sld [smem:[#allocation0]]
  $region502: #{tpu_custom_call.1} parent=0
    _
  %s6 = ssub.s32 1, %s4
  %s7 = scalar_select 0, %s6, %s4
  $region1: #{tpu_custom_call.1} parent=0
    #allocation4 [shape = 'u8[512]{0}', space=smem, size = 0x200, scoped, tag = 'input window, operand 0, single buffered']
    #allocation5 [shape = 's32[1]{0}', space=sflag, size = 0x4, scoped, tag = 'scoped memory for tpu_custom_call.1']
    #allocation6 [shape = 's32[1]{0}', space=sflag, size = 0x4, scoped, tag = 'scoped memory for tpu_custom_call.1']
    #allocation7 [shape = 'u8[8192]{0}', space=vmem, size = 0x2000, scoped, tag = 'output window, operand 0, single buffered']
    %8 = vsyncpa [#allocation6], 0
    %9 = vsyncpa [#allocation5], 0
    // Predicated region
    $region2: #{tpu_custom_call.1} parent=1 // pred_check
      _
    $region3: #{tpu_custom_call.1} parent=1 // pred_check_branch
      %11 = sbr.rel (0) target = $region5
    $region4: #{tpu_custom_call.1} parent=1 // pred_region
      %13 = vsyncadd [#allocation6], 0
      %s15 = sshll.u32 %s0, 4
      %s16 = int_to_ptr.vmem [resolvable:$true] %s15
      %18 = dma.vmem_to_smem %s16, 16, [#allocation4], [#allocation6]
    $region5: #{tpu_custom_call.1} parent=1 // pred_fallthru
      _
    // Predicated region
    $region6: #{tpu_custom_call.1} parent=1 // pred_check
      _
    $region7: #{tpu_custom_call.1} parent=1 // pred_check_branch
      %20 = sbr.rel (0) target = $region9
    $region8: #{tpu_custom_call.1} parent=1 // pred_region
      _
    $region9: #{tpu_custom_call.1} parent=1 // pred_fallthru
      _
    // Predicated region
    $region10: #{tpu_custom_call.1} parent=1 // pred_check
      _
    $region11: #{tpu_custom_call.1} parent=1 // pred_check_branch
      %22 = sbr.rel (0) target = $region13
    $region12: #{tpu_custom_call.1} parent=1 // pred_region
      %24 = dma.done [#allocation6], 16
    $region13: #{tpu_custom_call.1} parent=1 // pred_fallthru
      _
    %25 = sfence
    %s26 = sld [smem:[#allocation4]]
    %s27 = scalar_lea.vmem %s2, %s26
    // Predicated region
    $region14: #{tpu_custom_call.1} parent=1 // pred_check
      _
    $region15: #{tpu_custom_call.1} parent=1 // pred_check_branch
      %29 = sbr.rel target = $region17
    $region16: #{tpu_custom_call.1} parent=1 // pred_region
      // Predicated region
      $region29: #{tpu_custom_call.1} parent=16 // pred_check
        _
      $region30: #{tpu_custom_call.1} parent=16 // pred_check_branch
        %45 = sbr.rel (0) target = $region32
      $region31: #{tpu_custom_call.1} parent=16 // pred_region
        %s47 = ssub.s32 2, 1
        loop: start=0, step=1, limit=1
        $region33: #{tpu_custom_call.1} parent=31 // loop_pre_header
          _
        $region34: #{tpu_custom_call.1} parent=31 // loop_header
          %s49 = sphi 0, %s53
          %p50 = scmp.ge.s32.totalorder %s49, 1
          %s54 = sphi %s27, %s27
          %s55 = sphi [#allocation2], [#allocation2]
        $region35: #{tpu_custom_call.1} parent=31 // loop_header_branch
          %52 = sbr.rel (%p50) target = $region39
        $region36: #{tpu_custom_call.1} parent=31 // loop_body
          %v56 = vld [vmem:[%s54] sm:%s47]
          %57 = vst [vmem:[%s55] sm:%s47] %v56
        $region37: #{tpu_custom_call.1} parent=31 // loop_footer
          %s53 = sadd.s32 1, %s49
        $region38: #{tpu_custom_call.1} parent=31 // loop_footer_branch
          %48 = sbr.rel target = $region34
        $region39: #{tpu_custom_call.1} parent=31 // loop_exit
          _
      $region32: #{tpu_custom_call.1} parent=16 // pred_fallthru
        _
    $region17: #{tpu_custom_call.1} parent=1 // pred_fallthru
      _
    // Predicated region
    $region18: #{tpu_custom_call.1} parent=1 // pred_check
      _
    $region19: #{tpu_custom_call.1} parent=1 // pred_check_branch
      %31 = sbr.rel (0) target = $region21
    $region20: #{tpu_custom_call.1} parent=1 // pred_region
      %s33 = ssub.s32 2, 1
      loop: start=0, step=1, limit=1
      $region22: #{tpu_custom_call.1} parent=20 // loop_pre_header
        _
      $region23: #{tpu_custom_call.1} parent=20 // loop_header
        %s35 = sphi 0, %s39
        %p36 = scmp.ge.s32.totalorder %s35, 1
        %s40 = sphi %s27, %s27
        %s41 = sphi [#allocation2], [#allocation2]
      $region24: #{tpu_custom_call.1} parent=20 // loop_header_branch
        %38 = sbr.rel (%p36) target = $region28
      $region25: #{tpu_custom_call.1} parent=20 // loop_body
        %v42 = vld [vmem:[%s40] sm:%s33]
        %43 = vst [vmem:[%s41] sm:%s33] %v42
      $region26: #{tpu_custom_call.1} parent=20 // loop_footer
        %s39 = sadd.s32 1, %s35
      $region27: #{tpu_custom_call.1} parent=20 // loop_footer_branch
        %34 = sbr.rel target = $region23
      $region28: #{tpu_custom_call.1} parent=20 // loop_exit
        _
    $region21: #{tpu_custom_call.1} parent=1 // pred_fallthru
      _
    // Predicated region
    $region40: #{tpu_custom_call.1} parent=1 // pred_check
      _
    $region41: #{tpu_custom_call.1} parent=1 // pred_check_branch
      %60 = sbr.rel (0) target = $region43
    $region42: #{tpu_custom_call.1} parent=1 // pred_region
      %61 = vsyncadd [#allocation3], 16
    $region43: #{tpu_custom_call.1} parent=1 // pred_fallthru
      _
    %s62 = sld [smem:[#allocation4 + $0x1]]
    %s63 = scalar_lea.vmem %s2, %s62
    %s64 = scalar_lea.vmem [#allocation2], 1
    %s65 = scalar_lea.sflag [#allocation3], 1
    // Predicated region
    $region44: #{tpu_custom_call.1} parent=1 // pred_check
      _
    $region45: #{tpu_custom_call.1} parent=1 // pred_check_branch
      %67 = sbr.rel target = $region47
    $region46: #{tpu_custom_call.1} parent=1 // pred_region
      // Predicated region
      $region59: #{tpu_custom_call.1} parent=46 // pred_check
        _
      $region60: #{tpu_custom_call.1} parent=46 // pred_check_branch
        %83 = sbr.rel (0) target = $region62
      $region61: #{tpu_custom_call.1} parent=46 // pred_region
        %s85 = ssub.s32 2, 1
        loop: start=0, step=1, limit=1
        $region63: #{tpu_custom_call.1} parent=61 // loop_pre_header
          _
        $region64: #{tpu_custom_call.1} parent=61 // loop_header
          %s87 = sphi 0, %s91
          %p88 = scmp.ge.s32.totalorder %s87, 1
          %s92 = sphi %s63, %s63
          %s93 = sphi %s64, %s64
        $region65: #{tpu_custom_call.1} parent=61 // loop_header_branch
          %90 = sbr.rel (%p88) target = $region69
        $region66: #{tpu_custom_call.1} parent=61 // loop_body
          %v94 = vld [vmem:[%s92] sm:%s85]
          %95 = vst [vmem:[%s93] sm:%s85] %v94
        $region67: #{tpu_custom_call.1} parent=61 // loop_footer
          %s91 = sadd.s32 1, %s87
        $region68: #{tpu_custom_call.1} parent=61 // loop_footer_branch
          %86 = sbr.rel target = $region64
        $region69: #{tpu_custom_call.1} parent=61 // loop_exit
          _
      $region62: #{tpu_custom_call.1} parent=46 // pred_fallthru
        _
    $region47: #{tpu_custom_call.1} parent=1 // pred_fallthru
      _
    // Predicated region
    $region48: #{tpu_custom_call.1} parent=1 // pred_check
      _
    $region49: #{tpu_custom_call.1} parent=1 // pred_check_branch
      %69 = sbr.rel (0) target = $region51
    $region50: #{tpu_custom_call.1} parent=1 // pred_region
      %s71 = ssub.s32 2, 1
      loop: start=0, step=1, limit=1
      $region52: #{tpu_custom_call.1} parent=50 // loop_pre_header
        _
      $region53: #{tpu_custom_call.1} parent=50 // loop_header
        %s73 = sphi 0, %s77
        %p74 = scmp.ge.s32.totalorder %s73, 1
        %s78 = sphi %s63, %s63
        %s79 = sphi %s64, %s64
      $region54: #{tpu_custom_call.1} parent=50 // loop_header_branch
        %76 = sbr.rel (%p74) target = $region58
      $region55: #{tpu_custom_call.1} parent=50 // loop_body
        %v80 = vld [vmem:[%s78] sm:%s71]
        %81 = vst [vmem:[%s79] sm:%s71] %v80
      $region56: #{tpu_custom_call.1} parent=50 // loop_footer
        %s77 = sadd.s32 1, %s73
      $region57: #{tpu_custom_call.1} parent=50 // loop_footer_branch
        %72 = sbr.rel target = $region53
      $region58: #{tpu_custom_call.1} parent=50 // loop_exit
        _
    $region51: #{tpu_custom_call.1} parent=1 // pred_fallthru
      _
    // Predicated region
    $region70: #{tpu_custom_call.1} parent=1 // pred_check
      _
    $region71: #{tpu_custom_call.1} parent=1 // pred_check_branch
      %98 = sbr.rel (0) target = $region73
    $region72: #{tpu_custom_call.1} parent=1 // pred_region
      %99 = vsyncadd %s65, 16
    $region73: #{tpu_custom_call.1} parent=1 // pred_fallthru
      _
    %s100 = sld [smem:[#allocation4 + $0x2]]
    %s101 = scalar_lea.vmem %s2, %s100
    %s102 = scalar_lea.vmem [#allocation2], 2
    %s103 = scalar_lea.sflag [#allocation3], 2
    // Predicated region
    $region74: #{tpu_custom_call.1} parent=1 // pred_check
      _
    $region75: #{tpu_custom_call.1} parent=1 // pred_check_branch
      %105 = sbr.rel target = $region77
    $region76: #{tpu_custom_call.1} parent=1 // pred_region
      // Predicated region
      $region89: #{tpu_custom_call.1} parent=76 // pred_check
        _
      $region90: #{tpu_custom_call.1} parent=76 // pred_check_branch
        %121 = sbr.rel (0) target = $region92
      $region91: #{tpu_custom_call.1} parent=76 // pred_region
        %s123 = ssub.s32 2, 1
        loop: start=0, step=1, limit=1
        $region93: #{tpu_custom_call.1} parent=91 // loop_pre_header
          _
        $region94: #{tpu_custom_call.1} parent=91 // loop_header
          %s125 = sphi 0, %s129
          %p126 = scmp.ge.s32.totalorder %s125, 1
          %s130 = sphi %s101, %s101
          %s131 = sphi %s102, %s102
        $region95: #{tpu_custom_call.1} parent=91 // loop_header_branch
          %128 = sbr.rel (%p126) target = $region99
        $region96: #{tpu_custom_call.1} parent=91 // loop_body
          %v132 = vld [vmem:[%s130] sm:%s123]
          %133 = vst [vmem:[%s131] sm:%s123] %v132
        $region97: #{tpu_custom_call.1} parent=91 // loop_footer
          %s129 = sadd.s32 1, %s125
        $region98: #{tpu_custom_call.1} parent=91 // loop_footer_branch
          %124 = sbr.rel target = $region94
        $region99: #{tpu_custom_call.1} parent=91 // loop_exit
          _
      $region92: #{tpu_custom_call.1} parent=76 // pred_fallthru
        _
    $region77: #{tpu_custom_call.1} parent=1 // pred_fallthru
      _
    // Predicated region
    $region78: #{tpu_custom_call.1} parent=1 // pred_check
      _
    $region79: #{tpu_custom_call.1} parent=1 // pred_check_branch
      %107 = sbr.rel (0) target = $region81
    $region80: #{tpu_custom_call.1} parent=1 // pred_region
      %s109 = ssub.s32 2, 1
      loop: start=0, step=1, limit=1
      $region82: #{tpu_custom_call.1} parent=80 // loop_pre_header
        _
      $region83: #{tpu_custom_call.1} parent=80 // loop_header
        %s111 = sphi 0, %s115
        %p112 = scmp.ge.s32.totalorder %s111, 1
        %s116 = sphi %s101, %s101
        %s117 = sphi %s102, %s102
      $region84: #{tpu_custom_call.1} parent=80 // loop_header_branch
        %114 = sbr.rel (%p112) target = $region88
      $region85: #{tpu_custom_call.1} parent=80 // loop_body
        %v118 = vld [vmem:[%s116] sm:%s109]
        %119 = vst [vmem:[%s117] sm:%s109] %v118
      $region86: #{tpu_custom_call.1} parent=80 // loop_footer
        %s115 = sadd.s32 1, %s111
      $region87: #{tpu_custom_call.1} parent=80 // loop_footer_branch
        %110 = sbr.rel target = $region83
      $region88: #{tpu_custom_call.1} parent=80 // loop_exit
        _
    $region81: #{tpu_custom_call.1} parent=1 // pred_fallthru
      _
    // Predicated region
    $region100: #{tpu_custom_call.1} parent=1 // pred_check
      _
    $region101: #{tpu_custom_call.1} parent=1 // pred_check_branch
      %136 = sbr.rel (0) target = $region103
    $region102: #{tpu_custom_call.1} parent=1 // pred_region
      %137 = vsyncadd %s103, 16
    $region103: #{tpu_custom_call.1} parent=1 // pred_fallthru
      _
    %s138 = sld [smem:[#allocation4 + $0x3]]
    %s139 = scalar_lea.vmem %s2, %s138
    %s140 = scalar_lea.vmem [#allocation2], 3
    %s141 = scalar_lea.sflag [#allocation3], 3
    // Predicated region
    $region104: #{tpu_custom_call.1} parent=1 // pred_check
      _
    $region105: #{tpu_custom_call.1} parent=1 // pred_check_branch
      %143 = sbr.rel target = $region107
    $region106: #{tpu_custom_call.1} parent=1 // pred_region
      // Predicated region
      $region119: #{tpu_custom_call.1} parent=106 // pred_check
        _
      $region120: #{tpu_custom_call.1} parent=106 // pred_check_branch
        %159 = sbr.rel (0) target = $region122
      $region121: #{tpu_custom_call.1} parent=106 // pred_region
        %s161 = ssub.s32 2, 1
        loop: start=0, step=1, limit=1
        $region123: #{tpu_custom_call.1} parent=121 // loop_pre_header
          _
        $region124: #{tpu_custom_call.1} parent=121 // loop_header
          %s163 = sphi 0, %s167
          %p164 = scmp.ge.s32.totalorder %s163, 1
          %s168 = sphi %s139, %s139
          %s169 = sphi %s140, %s140
        $region125: #{tpu_custom_call.1} parent=121 // loop_header_branch
          %166 = sbr.rel (%p164) target = $region129
        $region126: #{tpu_custom_call.1} parent=121 // loop_body
          %v170 = vld [vmem:[%s168] sm:%s161]
          %171 = vst [vmem:[%s169] sm:%s161] %v170
        $region127: #{tpu_custom_call.1} parent=121 // loop_footer
          %s167 = sadd.s32 1, %s163
        $region128: #{tpu_custom_call.1} parent=121 // loop_footer_branch
          %162 = sbr.rel target = $region124
        $region129: #{tpu_custom_call.1} parent=121 // loop_exit
          _
      $region122: #{tpu_custom_call.1} parent=106 // pred_fallthru
        _
    $region107: #{tpu_custom_call.1} parent=1 // pred_fallthru
      _
    // Predicated region
    $region108: #{tpu_custom_call.1} parent=1 // pred_check
      _
    $region109: #{tpu_custom_call.1} parent=1 // pred_check_branch
      %145 = sbr.rel (0) target = $region111
    $region110: #{tpu_custom_call.1} parent=1 // pred_region
      %s147 = ssub.s32 2, 1
      loop: start=0, step=1, limit=1
      $region112: #{tpu_custom_call.1} parent=110 // loop_pre_header
        _
      $region113: #{tpu_custom_call.1} parent=110 // loop_header
        %s149 = sphi 0, %s153
        %p150 = scmp.ge.s32.totalorder %s149, 1
        %s154 = sphi %s139, %s139
        %s155 = sphi %s140, %s140
      $region114: #{tpu_custom_call.1} parent=110 // loop_header_branch
        %152 = sbr.rel (%p150) target = $region118
      $region115: #{tpu_custom_call.1} parent=110 // loop_body
        %v156 = vld [vmem:[%s154] sm:%s147]
        %157 = vst [vmem:[%s155] sm:%s147] %v156
      $region116: #{tpu_custom_call.1} parent=110 // loop_footer
        %s153 = sadd.s32 1, %s149
      $region117: #{tpu_custom_call.1} parent=110 // loop_footer_branch
        %148 = sbr.rel target = $region113
      $region118: #{tpu_custom_call.1} parent=110 // loop_exit
        _
    $region111: #{tpu_custom_call.1} parent=1 // pred_fallthru
      _
    // Predicated region
    $region130: #{tpu_custom_call.1} parent=1 // pred_check
      _
    $region131: #{tpu_custom_call.1} parent=1 // pred_check_branch
      %174 = sbr.rel (0) target = $region133
    $region132: #{tpu_custom_call.1} parent=1 // pred_region
      %175 = vsyncadd %s141, 16
    $region133: #{tpu_custom_call.1} parent=1 // pred_fallthru
      _
    %s176 = sld [smem:[#allocation4 + $0x4]]
    %s177 = scalar_lea.vmem %s2, %s176
    %s178 = scalar_lea.vmem [#allocation2], 4
    %s179 = scalar_lea.sflag [#allocation3], 4
    // Predicated region
    $region134: #{tpu_custom_call.1} parent=1 // pred_check
      _
    $region135: #{tpu_custom_call.1} parent=1 // pred_check_branch
      %181 = sbr.rel target = $region137
    $region136: #{tpu_custom_call.1} parent=1 // pred_region
      // Predicated region
      $region149: #{tpu_custom_call.1} parent=136 // pred_check
        _
      $region150: #{tpu_custom_call.1} parent=136 // pred_check_branch
        %197 = sbr.rel (0) target = $region152
      $region151: #{tpu_custom_call.1} parent=136 // pred_region
        %s199 = ssub.s32 2, 1
        loop: start=0, step=1, limit=1
        $region153: #{tpu_custom_call.1} parent=151 // loop_pre_header
          _
        $region154: #{tpu_custom_call.1} parent=151 // loop_header
          %s201 = sphi 0, %s205
          %p202 = scmp.ge.s32.totalorder %s201, 1
          %s206 = sphi %s177, %s177
          %s207 = sphi %s178, %s178
        $region155: #{tpu_custom_call.1} parent=151 // loop_header_branch
          %204 = sbr.rel (%p202) target = $region159
        $region156: #{tpu_custom_call.1} parent=151 // loop_body
          %v208 = vld [vmem:[%s206] sm:%s199]
          %209 = vst [vmem:[%s207] sm:%s199] %v208
        $region157: #{tpu_custom_call.1} parent=151 // loop_footer
          %s205 = sadd.s32 1, %s201
        $region158: #{tpu_custom_call.1} parent=151 // loop_footer_branch
          %200 = sbr.rel target = $region154
        $region159: #{tpu_custom_call.1} parent=151 // loop_exit
          _
      $region152: #{tpu_custom_call.1} parent=136 // pred_fallthru
        _
    $region137: #{tpu_custom_call.1} parent=1 // pred_fallthru
      _
    // Predicated region
    $region138: #{tpu_custom_call.1} parent=1 // pred_check
      _
    $region139: #{tpu_custom_call.1} parent=1 // pred_check_branch
      %183 = sbr.rel (0) target = $region141
    $region140: #{tpu_custom_call.1} parent=1 // pred_region
      %s185 = ssub.s32 2, 1
      loop: start=0, step=1, limit=1
      $region142: #{tpu_custom_call.1} parent=140 // loop_pre_header
        _
      $region143: #{tpu_custom_call.1} parent=140 // loop_header
        %s187 = sphi 0, %s191
        %p188 = scmp.ge.s32.totalorder %s187, 1
        %s192 = sphi %s177, %s177
        %s193 = sphi %s178, %s178
      $region144: #{tpu_custom_call.1} parent=140 // loop_header_branch
        %190 = sbr.rel (%p188) target = $region148
      $region145: #{tpu_custom_call.1} parent=140 // loop_body
        %v194 = vld [vmem:[%s192] sm:%s185]
        %195 = vst [vmem:[%s193] sm:%s185] %v194
      $region146: #{tpu_custom_call.1} parent=140 // loop_footer
        %s191 = sadd.s32 1, %s187
      $region147: #{tpu_custom_call.1} parent=140 // loop_footer_branch
        %186 = sbr.rel target = $region143
      $region148: #{tpu_custom_call.1} parent=140 // loop_exit
        _
    $region141: #{tpu_custom_call.1} parent=1 // pred_fallthru
      _
    // Predicated region
    $region160: #{tpu_custom_call.1} parent=1 // pred_check
      _
    $region161: #{tpu_custom_call.1} parent=1 // pred_check_branch
      %212 = sbr.rel (0) target = $region163
    $region162: #{tpu_custom_call.1} parent=1 // pred_region
      %213 = vsyncadd %s179, 16
    $region163: #{tpu_custom_call.1} parent=1 // pred_fallthru
      _
    %s214 = sld [smem:[#allocation4 + $0x5]]
    %s215 = scalar_lea.vmem %s2, %s214
    %s216 = scalar_lea.vmem [#allocation2], 5
    %s217 = scalar_lea.sflag [#allocation3], 5
    // Predicated region
    $region164: #{tpu_custom_call.1} parent=1 // pred_check
      _
    $region165: #{tpu_custom_call.1} parent=1 // pred_check_branch
      %219 = sbr.rel target = $region167
    $region166: #{tpu_custom_call.1} parent=1 // pred_region
      // Predicated region
      $region179: #{tpu_custom_call.1} parent=166 // pred_check
        _
      $region180: #{tpu_custom_call.1} parent=166 // pred_check_branch
        %235 = sbr.rel (0) target = $region182
      $region181: #{tpu_custom_call.1} parent=166 // pred_region
        %s237 = ssub.s32 2, 1
        loop: start=0, step=1, limit=1
        $region183: #{tpu_custom_call.1} parent=181 // loop_pre_header
          _
        $region184: #{tpu_custom_call.1} parent=181 // loop_header
          %s239 = sphi 0, %s243
          %p240 = scmp.ge.s32.totalorder %s239, 1
          %s244 = sphi %s215, %s215
          %s245 = sphi %s216, %s216
        $region185: #{tpu_custom_call.1} parent=181 // loop_header_branch
          %242 = sbr.rel (%p240) target = $region189
        $region186: #{tpu_custom_call.1} parent=181 // loop_body
          %v246 = vld [vmem:[%s244] sm:%s237]
          %247 = vst [vmem:[%s245] sm:%s237] %v246
        $region187: #{tpu_custom_call.1} parent=181 // loop_footer
          %s243 = sadd.s32 1, %s239
        $region188: #{tpu_custom_call.1} parent=181 // loop_footer_branch
          %238 = sbr.rel target = $region184
        $region189: #{tpu_custom_call.1} parent=181 // loop_exit
          _
      $region182: #{tpu_custom_call.1} parent=166 // pred_fallthru
        _
    $region167: #{tpu_custom_call.1} parent=1 // pred_fallthru
      _
    // Predicated region
    $region168: #{tpu_custom_call.1} parent=1 // pred_check
      _
    $region169: #{tpu_custom_call.1} parent=1 // pred_check_branch
      %221 = sbr.rel (0) target = $region171
    $region170: #{tpu_custom_call.1} parent=1 // pred_region
      %s223 = ssub.s32 2, 1
      loop: start=0, step=1, limit=1
      $region172: #{tpu_custom_call.1} parent=170 // loop_pre_header
        _
      $region173: #{tpu_custom_call.1} parent=170 // loop_header
        %s225 = sphi 0, %s229
        %p226 = scmp.ge.s32.totalorder %s225, 1
        %s230 = sphi %s215, %s215
        %s231 = sphi %s216, %s216
      $region174: #{tpu_custom_call.1} parent=170 // loop_header_branch
        %228 = sbr.rel (%p226) target = $region178
      $region175: #{tpu_custom_call.1} parent=170 // loop_body
        %v232 = vld [vmem:[%s230] sm:%s223]
        %233 = vst [vmem:[%s231] sm:%s223] %v232
      $region176: #{tpu_custom_call.1} parent=170 // loop_footer
        %s229 = sadd.s32 1, %s225
      $region177: #{tpu_custom_call.1} parent=170 // loop_footer_branch
        %224 = sbr.rel target = $region173
      $region178: #{tpu_custom_call.1} parent=170 // loop_exit
        _
    $region171: #{tpu_custom_call.1} parent=1 // pred_fallthru
      _
    // Predicated region
    $region190: #{tpu_custom_call.1} parent=1 // pred_check
      _
    $region191: #{tpu_custom_call.1} parent=1 // pred_check_branch
      %250 = sbr.rel (0) target = $region193
    $region192: #{tpu_custom_call.1} parent=1 // pred_region
      %251 = vsyncadd %s217, 16
    $region193: #{tpu_custom_call.1} parent=1 // pred_fallthru
      _
    %s252 = sld [smem:[#allocation4 + $0x6]]
    %s253 = scalar_lea.vmem %s2, %s252
    %s254 = scalar_lea.vmem [#allocation2], 6
    %s255 = scalar_lea.sflag [#allocation3], 6
    // Predicated region
    $region194: #{tpu_custom_call.1} parent=1 // pred_check
      _
    $region195: #{tpu_custom_call.1} parent=1 // pred_check_branch
      %257 = sbr.rel target = $region197
    $region196: #{tpu_custom_call.1} parent=1 // pred_region
      // Predicated region
      $region209: #{tpu_custom_call.1} parent=196 // pred_check
        _
      $region210: #{tpu_custom_call.1} parent=196 // pred_check_branch
        %273 = sbr.rel (0) target = $region212
      $region211: #{tpu_custom_call.1} parent=196 // pred_region
        %s275 = ssub.s32 2, 1
        loop: start=0, step=1, limit=1
        $region213: #{tpu_custom_call.1} parent=211 // loop_pre_header
          _
        $region214: #{tpu_custom_call.1} parent=211 // loop_header
          %s277 = sphi 0, %s281
          %p278 = scmp.ge.s32.totalorder %s277, 1
          %s282 = sphi %s253, %s253
          %s283 = sphi %s254, %s254
        $region215: #{tpu_custom_call.1} parent=211 // loop_header_branch
          %280 = sbr.rel (%p278) target = $region219
        $region216: #{tpu_custom_call.1} parent=211 // loop_body
          %v284 = vld [vmem:[%s282] sm:%s275]
          %285 = vst [vmem:[%s283] sm:%s275] %v284
        $region217: #{tpu_custom_call.1} parent=211 // loop_footer
          %s281 = sadd.s32 1, %s277
        $region218: #{tpu_custom_call.1} parent=211 // loop_footer_branch
          %276 = sbr.rel target = $region214
        $region219: #{tpu_custom_call.1} parent=211 // loop_exit
          _
      $region212: #{tpu_custom_call.1} parent=196 // pred_fallthru
        _
    $region197: #{tpu_custom_call.1} parent=1 // pred_fallthru
      _
    // Predicated region
    $region198: #{tpu_custom_call.1} parent=1 // pred_check
      _
    $region199: #{tpu_custom_call.1} parent=1 // pred_check_branch
      %259 = sbr.rel (0) target = $region201
    $region200: #{tpu_custom_call.1} parent=1 // pred_region
      %s261 = ssub.s32 2, 1
      loop: start=0, step=1, limit=1
      $region202: #{tpu_custom_call.1} parent=200 // loop_pre_header
        _
      $region203: #{tpu_custom_call.1} parent=200 // loop_header
        %s263 = sphi 0, %s267
        %p264 = scmp.ge.s32.totalorder %s263, 1
        %s268 = sphi %s253, %s253
        %s269 = sphi %s254, %s254
      $region204: #{tpu_custom_call.1} parent=200 // loop_header_branch
        %266 = sbr.rel (%p264) target = $region208
      $region205: #{tpu_custom_call.1} parent=200 // loop_body
        %v270 = vld [vmem:[%s268] sm:%s261]
        %271 = vst [vmem:[%s269] sm:%s261] %v270
      $region206: #{tpu_custom_call.1} parent=200 // loop_footer
        %s267 = sadd.s32 1, %s263
      $region207: #{tpu_custom_call.1} parent=200 // loop_footer_branch
        %262 = sbr.rel target = $region203
      $region208: #{tpu_custom_call.1} parent=200 // loop_exit
        _
    $region201: #{tpu_custom_call.1} parent=1 // pred_fallthru
      _
    // Predicated region
    $region220: #{tpu_custom_call.1} parent=1 // pred_check
      _
    $region221: #{tpu_custom_call.1} parent=1 // pred_check_branch
      %288 = sbr.rel (0) target = $region223
    $region222: #{tpu_custom_call.1} parent=1 // pred_region
      %289 = vsyncadd %s255, 16
    $region223: #{tpu_custom_call.1} parent=1 // pred_fallthru
      _
    %s290 = sld [smem:[#allocation4 + $0x7]]
    %s291 = scalar_lea.vmem %s2, %s290
    %s292 = scalar_lea.vmem [#allocation2], 7
    %s293 = scalar_lea.sflag [#allocation3], 7
    // Predicated region
    $region224: #{tpu_custom_call.1} parent=1 // pred_check
      _
    $region225: #{tpu_custom_call.1} parent=1 // pred_check_branch
      %295 = sbr.rel target = $region227
    $region226: #{tpu_custom_call.1} parent=1 // pred_region
      // Predicated region
      $region239: #{tpu_custom_call.1} parent=226 // pred_check
        _
      $region240: #{tpu_custom_call.1} parent=226 // pred_check_branch
        %311 = sbr.rel (0) target = $region242
      $region241: #{tpu_custom_call.1} parent=226 // pred_region
        %s313 = ssub.s32 2, 1
        loop: start=0, step=1, limit=1
        $region243: #{tpu_custom_call.1} parent=241 // loop_pre_header
          _
        $region244: #{tpu_custom_call.1} parent=241 // loop_header
          %s315 = sphi 0, %s319
          %p316 = scmp.ge.s32.totalorder %s315, 1
          %s320 = sphi %s291, %s291
          %s321 = sphi %s292, %s292
        $region245: #{tpu_custom_call.1} parent=241 // loop_header_branch
          %318 = sbr.rel (%p316) target = $region249
        $region246: #{tpu_custom_call.1} parent=241 // loop_body
          %v322 = vld [vmem:[%s320] sm:%s313]
          %323 = vst [vmem:[%s321] sm:%s313] %v322
        $region247: #{tpu_custom_call.1} parent=241 // loop_footer
          %s319 = sadd.s32 1, %s315
        $region248: #{tpu_custom_call.1} parent=241 // loop_footer_branch
          %314 = sbr.rel target = $region244
        $region249: #{tpu_custom_call.1} parent=241 // loop_exit
          _
      $region242: #{tpu_custom_call.1} parent=226 // pred_fallthru
        _
    $region227: #{tpu_custom_call.1} parent=1 // pred_fallthru
      _
    // Predicated region
    $region228: #{tpu_custom_call.1} parent=1 // pred_check
      _
    $region229: #{tpu_custom_call.1} parent=1 // pred_check_branch
      %297 = sbr.rel (0) target = $region231
    $region230: #{tpu_custom_call.1} parent=1 // pred_region
      %s299 = ssub.s32 2, 1
      loop: start=0, step=1, limit=1
      $region232: #{tpu_custom_call.1} parent=230 // loop_pre_header
        _
      $region233: #{tpu_custom_call.1} parent=230 // loop_header
        %s301 = sphi 0, %s305
        %p302 = scmp.ge.s32.totalorder %s301, 1
        %s306 = sphi %s291, %s291
        %s307 = sphi %s292, %s292
      $region234: #{tpu_custom_call.1} parent=230 // loop_header_branch
        %304 = sbr.rel (%p302) target = $region238
      $region235: #{tpu_custom_call.1} parent=230 // loop_body
        %v308 = vld [vmem:[%s306] sm:%s299]
        %309 = vst [vmem:[%s307] sm:%s299] %v308
      $region236: #{tpu_custom_call.1} parent=230 // loop_footer
        %s305 = sadd.s32 1, %s301
      $region237: #{tpu_custom_call.1} parent=230 // loop_footer_branch
        %300 = sbr.rel target = $region233
      $region238: #{tpu_custom_call.1} parent=230 // loop_exit
        _
    $region231: #{tpu_custom_call.1} parent=1 // pred_fallthru
      _
    // Predicated region
    $region250: #{tpu_custom_call.1} parent=1 // pred_check
      _
    $region251: #{tpu_custom_call.1} parent=1 // pred_check_branch
      %326 = sbr.rel (0) target = $region253
    $region252: #{tpu_custom_call.1} parent=1 // pred_region
      %327 = vsyncadd %s293, 16
    $region253: #{tpu_custom_call.1} parent=1 // pred_fallthru
      _
    %s328 = sld [smem:[#allocation4 + $0x8]]
    %s329 = scalar_lea.vmem %s2, %s328
    %s330 = scalar_lea.vmem [#allocation2], 8
    %s331 = scalar_lea.sflag [#allocation3], 8
    // Predicated region
    $region254: #{tpu_custom_call.1} parent=1 // pred_check
      _
    $region255: #{tpu_custom_call.1} parent=1 // pred_check_branch
      %333 = sbr.rel target = $region257
    $region256: #{tpu_custom_call.1} parent=1 // pred_region
      // Predicated region
      $region269: #{tpu_custom_call.1} parent=256 // pred_check
        _
      $region270: #{tpu_custom_call.1} parent=256 // pred_check_branch
        %349 = sbr.rel (0) target = $region272
      $region271: #{tpu_custom_call.1} parent=256 // pred_region
        %s351 = ssub.s32 2, 1
        loop: start=0, step=1, limit=1
        $region273: #{tpu_custom_call.1} parent=271 // loop_pre_header
          _
        $region274: #{tpu_custom_call.1} parent=271 // loop_header
          %s353 = sphi 0, %s357
          %p354 = scmp.ge.s32.totalorder %s353, 1
          %s358 = sphi %s329, %s329
          %s359 = sphi %s330, %s330
        $region275: #{tpu_custom_call.1} parent=271 // loop_header_branch
          %356 = sbr.rel (%p354) target = $region279
        $region276: #{tpu_custom_call.1} parent=271 // loop_body
          %v360 = vld [vmem:[%s358] sm:%s351]
          %361 = vst [vmem:[%s359] sm:%s351] %v360
        $region277: #{tpu_custom_call.1} parent=271 // loop_footer
          %s357 = sadd.s32 1, %s353
        $region278: #{tpu_custom_call.1} parent=271 // loop_footer_branch
          %352 = sbr.rel target = $region274
        $region279: #{tpu_custom_call.1} parent=271 // loop_exit
          _
      $region272: #{tpu_custom_call.1} parent=256 // pred_fallthru
        _
    $region257: #{tpu_custom_call.1} parent=1 // pred_fallthru
      _
    // Predicated region
    $region258: #{tpu_custom_call.1} parent=1 // pred_check
      _
    $region259: #{tpu_custom_call.1} parent=1 // pred_check_branch
      %335 = sbr.rel (0) target = $region261
    $region260: #{tpu_custom_call.1} parent=1 // pred_region
      %s337 = ssub.s32 2, 1
      loop: start=0, step=1, limit=1
      $region262: #{tpu_custom_call.1} parent=260 // loop_pre_header
        _
      $region263: #{tpu_custom_call.1} parent=260 // loop_header
        %s339 = sphi 0, %s343
        %p340 = scmp.ge.s32.totalorder %s339, 1
        %s344 = sphi %s329, %s329
        %s345 = sphi %s330, %s330
      $region264: #{tpu_custom_call.1} parent=260 // loop_header_branch
        %342 = sbr.rel (%p340) target = $region268
      $region265: #{tpu_custom_call.1} parent=260 // loop_body
        %v346 = vld [vmem:[%s344] sm:%s337]
        %347 = vst [vmem:[%s345] sm:%s337] %v346
      $region266: #{tpu_custom_call.1} parent=260 // loop_footer
        %s343 = sadd.s32 1, %s339
      $region267: #{tpu_custom_call.1} parent=260 // loop_footer_branch
        %338 = sbr.rel target = $region263
      $region268: #{tpu_custom_call.1} parent=260 // loop_exit
        _
    $region261: #{tpu_custom_call.1} parent=1 // pred_fallthru
      _
    // Predicated region
    $region280: #{tpu_custom_call.1} parent=1 // pred_check
      _
    $region281: #{tpu_custom_call.1} parent=1 // pred_check_branch
      %364 = sbr.rel (0) target = $region283
    $region282: #{tpu_custom_call.1} parent=1 // pred_region
      %365 = vsyncadd %s331, 16
    $region283: #{tpu_custom_call.1} parent=1 // pred_fallthru
      _
    %s366 = sld [smem:[#allocation4 + $0x9]]
    %s367 = scalar_lea.vmem %s2, %s366
    %s368 = scalar_lea.vmem [#allocation2], 9
    %s369 = scalar_lea.sflag [#allocation3], 9
    // Predicated region
    $region284: #{tpu_custom_call.1} parent=1 // pred_check
      _
    $region285: #{tpu_custom_call.1} parent=1 // pred_check_branch
      %371 = sbr.rel target = $region287
    $region286: #{tpu_custom_call.1} parent=1 // pred_region
      // Predicated region
      $region299: #{tpu_custom_call.1} parent=286 // pred_check
        _
      $region300: #{tpu_custom_call.1} parent=286 // pred_check_branch
        %387 = sbr.rel (0) target = $region302
      $region301: #{tpu_custom_call.1} parent=286 // pred_region
        %s389 = ssub.s32 2, 1
        loop: start=0, step=1, limit=1
        $region303: #{tpu_custom_call.1} parent=301 // loop_pre_header
          _
        $region304: #{tpu_custom_call.1} parent=301 // loop_header
          %s391 = sphi 0, %s395
          %p392 = scmp.ge.s32.totalorder %s391, 1
          %s396 = sphi %s367, %s367
          %s397 = sphi %s368, %s368
        $region305: #{tpu_custom_call.1} parent=301 // loop_header_branch
          %394 = sbr.rel (%p392) target = $region309
        $region306: #{tpu_custom_call.1} parent=301 // loop_body
          %v398 = vld [vmem:[%s396] sm:%s389]
          %399 = vst [vmem:[%s397] sm:%s389] %v398
        $region307: #{tpu_custom_call.1} parent=301 // loop_footer
          %s395 = sadd.s32 1, %s391
        $region308: #{tpu_custom_call.1} parent=301 // loop_footer_branch
          %390 = sbr.rel target = $region304
        $region309: #{tpu_custom_call.1} parent=301 // loop_exit
          _
      $region302: #{tpu_custom_call.1} parent=286 // pred_fallthru
        _
    $region287: #{tpu_custom_call.1} parent=1 // pred_fallthru
      _
    // Predicated region
    $region288: #{tpu_custom_call.1} parent=1 // pred_check
      _
    $region289: #{tpu_custom_call.1} parent=1 // pred_check_branch
      %373 = sbr.rel (0) target = $region291
    $region290: #{tpu_custom_call.1} parent=1 // pred_region
      %s375 = ssub.s32 2, 1
      loop: start=0, step=1, limit=1
      $region292: #{tpu_custom_call.1} parent=290 // loop_pre_header
        _
      $region293: #{tpu_custom_call.1} parent=290 // loop_header
        %s377 = sphi 0, %s381
        %p378 = scmp.ge.s32.totalorder %s377, 1
        %s382 = sphi %s367, %s367
        %s383 = sphi %s368, %s368
      $region294: #{tpu_custom_call.1} parent=290 // loop_header_branch
        %380 = sbr.rel (%p378) target = $region298
      $region295: #{tpu_custom_call.1} parent=290 // loop_body
        %v384 = vld [vmem:[%s382] sm:%s375]
        %385 = vst [vmem:[%s383] sm:%s375] %v384
      $region296: #{tpu_custom_call.1} parent=290 // loop_footer
        %s381 = sadd.s32 1, %s377
      $region297: #{tpu_custom_call.1} parent=290 // loop_footer_branch
        %376 = sbr.rel target = $region293
      $region298: #{tpu_custom_call.1} parent=290 // loop_exit
        _
    $region291: #{tpu_custom_call.1} parent=1 // pred_fallthru
      _
    // Predicated region
    $region310: #{tpu_custom_call.1} parent=1 // pred_check
      _
    $region311: #{tpu_custom_call.1} parent=1 // pred_check_branch
      %402 = sbr.rel (0) target = $region313
    $region312: #{tpu_custom_call.1} parent=1 // pred_region
      %403 = vsyncadd %s369, 16
    $region313: #{tpu_custom_call.1} parent=1 // pred_fallthru
      _
    %s404 = sld [smem:[#allocation4 + $0xa]]
    %s405 = scalar_lea.vmem %s2, %s404
    %s406 = scalar_lea.vmem [#allocation2], 10
    %s407 = scalar_lea.sflag [#allocation3], 10
    // Predicated region
    $region314: #{tpu_custom_call.1} parent=1 // pred_check
      _
    $region315: #{tpu_custom_call.1} parent=1 // pred_check_branch
      %409 = sbr.rel target = $region317
    $region316: #{tpu_custom_call.1} parent=1 // pred_region
      // Predicated region
      $region329: #{tpu_custom_call.1} parent=316 // pred_check
        _
      $region330: #{tpu_custom_call.1} parent=316 // pred_check_branch
        %425 = sbr.rel (0) target = $region332
      $region331: #{tpu_custom_call.1} parent=316 // pred_region
        %s427 = ssub.s32 2, 1
        loop: start=0, step=1, limit=1
        $region333: #{tpu_custom_call.1} parent=331 // loop_pre_header
          _
        $region334: #{tpu_custom_call.1} parent=331 // loop_header
          %s429 = sphi 0, %s433
          %p430 = scmp.ge.s32.totalorder %s429, 1
          %s434 = sphi %s405, %s405
          %s435 = sphi %s406, %s406
        $region335: #{tpu_custom_call.1} parent=331 // loop_header_branch
          %432 = sbr.rel (%p430) target = $region339
        $region336: #{tpu_custom_call.1} parent=331 // loop_body
          %v436 = vld [vmem:[%s434] sm:%s427]
          %437 = vst [vmem:[%s435] sm:%s427] %v436
        $region337: #{tpu_custom_call.1} parent=331 // loop_footer
          %s433 = sadd.s32 1, %s429
        $region338: #{tpu_custom_call.1} parent=331 // loop_footer_branch
          %428 = sbr.rel target = $region334
        $region339: #{tpu_custom_call.1} parent=331 // loop_exit
          _
      $region332: #{tpu_custom_call.1} parent=316 // pred_fallthru
        _
    $region317: #{tpu_custom_call.1} parent=1 // pred_fallthru
      _
    // Predicated region
    $region318: #{tpu_custom_call.1} parent=1 // pred_check
      _
    $region319: #{tpu_custom_call.1} parent=1 // pred_check_branch
      %411 = sbr.rel (0) target = $region321
    $region320: #{tpu_custom_call.1} parent=1 // pred_region
      %s413 = ssub.s32 2, 1
      loop: start=0, step=1, limit=1
      $region322: #{tpu_custom_call.1} parent=320 // loop_pre_header
        _
      $region323: #{tpu_custom_call.1} parent=320 // loop_header
        %s415 = sphi 0, %s419
        %p416 = scmp.ge.s32.totalorder %s415, 1
        %s420 = sphi %s405, %s405
        %s421 = sphi %s406, %s406
      $region324: #{tpu_custom_call.1} parent=320 // loop_header_branch
        %418 = sbr.rel (%p416) target = $region328
      $region325: #{tpu_custom_call.1} parent=320 // loop_body
        %v422 = vld [vmem:[%s420] sm:%s413]
        %423 = vst [vmem:[%s421] sm:%s413] %v422
      $region326: #{tpu_custom_call.1} parent=320 // loop_footer
        %s419 = sadd.s32 1, %s415
      $region327: #{tpu_custom_call.1} parent=320 // loop_footer_branch
        %414 = sbr.rel target = $region323
      $region328: #{tpu_custom_call.1} parent=320 // loop_exit
        _
    $region321: #{tpu_custom_call.1} parent=1 // pred_fallthru
      _
    // Predicated region
    $region340: #{tpu_custom_call.1} parent=1 // pred_check
      _
    $region341: #{tpu_custom_call.1} parent=1 // pred_check_branch
      %440 = sbr.rel (0) target = $region343
    $region342: #{tpu_custom_call.1} parent=1 // pred_region
      %441 = vsyncadd %s407, 16
    $region343: #{tpu_custom_call.1} parent=1 // pred_fallthru
      _
    %s442 = sld [smem:[#allocation4 + $0xb]]
    %s443 = scalar_lea.vmem %s2, %s442
    %s444 = scalar_lea.vmem [#allocation2], 11
    %s445 = scalar_lea.sflag [#allocation3], 11
    // Predicated region
    $region344: #{tpu_custom_call.1} parent=1 // pred_check
      _
    $region345: #{tpu_custom_call.1} parent=1 // pred_check_branch
      %447 = sbr.rel target = $region347
    $region346: #{tpu_custom_call.1} parent=1 // pred_region
      // Predicated region
      $region359: #{tpu_custom_call.1} parent=346 // pred_check
        _
      $region360: #{tpu_custom_call.1} parent=346 // pred_check_branch
        %463 = sbr.rel (0) target = $region362
      $region361: #{tpu_custom_call.1} parent=346 // pred_region
        %s465 = ssub.s32 2, 1
        loop: start=0, step=1, limit=1
        $region363: #{tpu_custom_call.1} parent=361 // loop_pre_header
          _
        $region364: #{tpu_custom_call.1} parent=361 // loop_header
          %s467 = sphi 0, %s471
          %p468 = scmp.ge.s32.totalorder %s467, 1
          %s472 = sphi %s443, %s443
          %s473 = sphi %s444, %s444
        $region365: #{tpu_custom_call.1} parent=361 // loop_header_branch
          %470 = sbr.rel (%p468) target = $region369
        $region366: #{tpu_custom_call.1} parent=361 // loop_body
          %v474 = vld [vmem:[%s472] sm:%s465]
          %475 = vst [vmem:[%s473] sm:%s465] %v474
        $region367: #{tpu_custom_call.1} parent=361 // loop_footer
          %s471 = sadd.s32 1, %s467
        $region368: #{tpu_custom_call.1} parent=361 // loop_footer_branch
          %466 = sbr.rel target = $region364
        $region369: #{tpu_custom_call.1} parent=361 // loop_exit
          _
      $region362: #{tpu_custom_call.1} parent=346 // pred_fallthru
        _
    $region347: #{tpu_custom_call.1} parent=1 // pred_fallthru
      _
    // Predicated region
    $region348: #{tpu_custom_call.1} parent=1 // pred_check
      _
    $region349: #{tpu_custom_call.1} parent=1 // pred_check_branch
      %449 = sbr.rel (0) target = $region351
    $region350: #{tpu_custom_call.1} parent=1 // pred_region
      %s451 = ssub.s32 2, 1
      loop: start=0, step=1, limit=1
      $region352: #{tpu_custom_call.1} parent=350 // loop_pre_header
        _
      $region353: #{tpu_custom_call.1} parent=350 // loop_header
        %s453 = sphi 0, %s457
        %p454 = scmp.ge.s32.totalorder %s453, 1
        %s458 = sphi %s443, %s443
        %s459 = sphi %s444, %s444
      $region354: #{tpu_custom_call.1} parent=350 // loop_header_branch
        %456 = sbr.rel (%p454) target = $region358
      $region355: #{tpu_custom_call.1} parent=350 // loop_body
        %v460 = vld [vmem:[%s458] sm:%s451]
        %461 = vst [vmem:[%s459] sm:%s451] %v460
      $region356: #{tpu_custom_call.1} parent=350 // loop_footer
        %s457 = sadd.s32 1, %s453
      $region357: #{tpu_custom_call.1} parent=350 // loop_footer_branch
        %452 = sbr.rel target = $region353
      $region358: #{tpu_custom_call.1} parent=350 // loop_exit
        _
    $region351: #{tpu_custom_call.1} parent=1 // pred_fallthru
      _
    // Predicated region
    $region370: #{tpu_custom_call.1} parent=1 // pred_check
      _
    $region371: #{tpu_custom_call.1} parent=1 // pred_check_branch
      %478 = sbr.rel (0) target = $region373
    $region372: #{tpu_custom_call.1} parent=1 // pred_region
      %479 = vsyncadd %s445, 16
    $region373: #{tpu_custom_call.1} parent=1 // pred_fallthru
      _
    %s480 = sld [smem:[#allocation4 + $0xc]]
    %s481 = scalar_lea.vmem %s2, %s480
    %s482 = scalar_lea.vmem [#allocation2], 12
    %s483 = scalar_lea.sflag [#allocation3], 12
    // Predicated region
    $region374: #{tpu_custom_call.1} parent=1 // pred_check
      _
    $region375: #{tpu_custom_call.1} parent=1 // pred_check_branch
      %485 = sbr.rel target = $region377
    $region376: #{tpu_custom_call.1} parent=1 // pred_region
      // Predicated region
      $region389: #{tpu_custom_call.1} parent=376 // pred_check
        _
      $region390: #{tpu_custom_call.1} parent=376 // pred_check_branch
        %501 = sbr.rel (0) target = $region392
      $region391: #{tpu_custom_call.1} parent=376 // pred_region
        %s503 = ssub.s32 2, 1
        loop: start=0, step=1, limit=1
        $region393: #{tpu_custom_call.1} parent=391 // loop_pre_header
          _
        $region394: #{tpu_custom_call.1} parent=391 // loop_header
          %s505 = sphi 0, %s509
          %p506 = scmp.ge.s32.totalorder %s505, 1
          %s510 = sphi %s481, %s481
          %s511 = sphi %s482, %s482
        $region395: #{tpu_custom_call.1} parent=391 // loop_header_branch
          %508 = sbr.rel (%p506) target = $region399
        $region396: #{tpu_custom_call.1} parent=391 // loop_body
          %v512 = vld [vmem:[%s510] sm:%s503]
          %513 = vst [vmem:[%s511] sm:%s503] %v512
        $region397: #{tpu_custom_call.1} parent=391 // loop_footer
          %s509 = sadd.s32 1, %s505
        $region398: #{tpu_custom_call.1} parent=391 // loop_footer_branch
          %504 = sbr.rel target = $region394
        $region399: #{tpu_custom_call.1} parent=391 // loop_exit
          _
      $region392: #{tpu_custom_call.1} parent=376 // pred_fallthru
        _
    $region377: #{tpu_custom_call.1} parent=1 // pred_fallthru
      _
    // Predicated region
    $region378: #{tpu_custom_call.1} parent=1 // pred_check
      _
    $region379: #{tpu_custom_call.1} parent=1 // pred_check_branch
      %487 = sbr.rel (0) target = $region381
    $region380: #{tpu_custom_call.1} parent=1 // pred_region
      %s489 = ssub.s32 2, 1
      loop: start=0, step=1, limit=1
      $region382: #{tpu_custom_call.1} parent=380 // loop_pre_header
        _
      $region383: #{tpu_custom_call.1} parent=380 // loop_header
        %s491 = sphi 0, %s495
        %p492 = scmp.ge.s32.totalorder %s491, 1
        %s496 = sphi %s481, %s481
        %s497 = sphi %s482, %s482
      $region384: #{tpu_custom_call.1} parent=380 // loop_header_branch
        %494 = sbr.rel (%p492) target = $region388
      $region385: #{tpu_custom_call.1} parent=380 // loop_body
        %v498 = vld [vmem:[%s496] sm:%s489]
        %499 = vst [vmem:[%s497] sm:%s489] %v498
      $region386: #{tpu_custom_call.1} parent=380 // loop_footer
        %s495 = sadd.s32 1, %s491
      $region387: #{tpu_custom_call.1} parent=380 // loop_footer_branch
        %490 = sbr.rel target = $region383
      $region388: #{tpu_custom_call.1} parent=380 // loop_exit
        _
    $region381: #{tpu_custom_call.1} parent=1 // pred_fallthru
      _
    // Predicated region
    $region400: #{tpu_custom_call.1} parent=1 // pred_check
      _
    $region401: #{tpu_custom_call.1} parent=1 // pred_check_branch
      %516 = sbr.rel (0) target = $region403
    $region402: #{tpu_custom_call.1} parent=1 // pred_region
      %517 = vsyncadd %s483, 16
    $region403: #{tpu_custom_call.1} parent=1 // pred_fallthru
      _
    %s518 = sld [smem:[#allocation4 + $0xd]]
    %s519 = scalar_lea.vmem %s2, %s518
    %s520 = scalar_lea.vmem [#allocation2], 13
    %s521 = scalar_lea.sflag [#allocation3], 13
    // Predicated region
    $region404: #{tpu_custom_call.1} parent=1 // pred_check
      _
    $region405: #{tpu_custom_call.1} parent=1 // pred_check_branch
      %523 = sbr.rel target = $region407
    $region406: #{tpu_custom_call.1} parent=1 // pred_region
      // Predicated region
      $region419: #{tpu_custom_call.1} parent=406 // pred_check
        _
      $region420: #{tpu_custom_call.1} parent=406 // pred_check_branch
        %539 = sbr.rel (0) target = $region422
      $region421: #{tpu_custom_call.1} parent=406 // pred_region
        %s541 = ssub.s32 2, 1
        loop: start=0, step=1, limit=1
        $region423: #{tpu_custom_call.1} parent=421 // loop_pre_header
          _
        $region424: #{tpu_custom_call.1} parent=421 // loop_header
          %s543 = sphi 0, %s547
          %p544 = scmp.ge.s32.totalorder %s543, 1
          %s548 = sphi %s519, %s519
          %s549 = sphi %s520, %s520
        $region425: #{tpu_custom_call.1} parent=421 // loop_header_branch
          %546 = sbr.rel (%p544) target = $region429
        $region426: #{tpu_custom_call.1} parent=421 // loop_body
          %v550 = vld [vmem:[%s548] sm:%s541]
          %551 = vst [vmem:[%s549] sm:%s541] %v550
        $region427: #{tpu_custom_call.1} parent=421 // loop_footer
          %s547 = sadd.s32 1, %s543
        $region428: #{tpu_custom_call.1} parent=421 // loop_footer_branch
          %542 = sbr.rel target = $region424
        $region429: #{tpu_custom_call.1} parent=421 // loop_exit
          _
      $region422: #{tpu_custom_call.1} parent=406 // pred_fallthru
        _
    $region407: #{tpu_custom_call.1} parent=1 // pred_fallthru
      _
    // Predicated region
    $region408: #{tpu_custom_call.1} parent=1 // pred_check
      _
    $region409: #{tpu_custom_call.1} parent=1 // pred_check_branch
      %525 = sbr.rel (0) target = $region411
    $region410: #{tpu_custom_call.1} parent=1 // pred_region
      %s527 = ssub.s32 2, 1
      loop: start=0, step=1, limit=1
      $region412: #{tpu_custom_call.1} parent=410 // loop_pre_header
        _
      $region413: #{tpu_custom_call.1} parent=410 // loop_header
        %s529 = sphi 0, %s533
        %p530 = scmp.ge.s32.totalorder %s529, 1
        %s534 = sphi %s519, %s519
        %s535 = sphi %s520, %s520
      $region414: #{tpu_custom_call.1} parent=410 // loop_header_branch
        %532 = sbr.rel (%p530) target = $region418
      $region415: #{tpu_custom_call.1} parent=410 // loop_body
        %v536 = vld [vmem:[%s534] sm:%s527]
        %537 = vst [vmem:[%s535] sm:%s527] %v536
      $region416: #{tpu_custom_call.1} parent=410 // loop_footer
        %s533 = sadd.s32 1, %s529
      $region417: #{tpu_custom_call.1} parent=410 // loop_footer_branch
        %528 = sbr.rel target = $region413
      $region418: #{tpu_custom_call.1} parent=410 // loop_exit
        _
    $region411: #{tpu_custom_call.1} parent=1 // pred_fallthru
      _
    // Predicated region
    $region430: #{tpu_custom_call.1} parent=1 // pred_check
      _
    $region431: #{tpu_custom_call.1} parent=1 // pred_check_branch
      %554 = sbr.rel (0) target = $region433
    $region432: #{tpu_custom_call.1} parent=1 // pred_region
      %555 = vsyncadd %s521, 16
    $region433: #{tpu_custom_call.1} parent=1 // pred_fallthru
      _
    %s556 = sld [smem:[#allocation4 + $0xe]]
    %s557 = scalar_lea.vmem %s2, %s556
    %s558 = scalar_lea.vmem [#allocation2], 14
    %s559 = scalar_lea.sflag [#allocation3], 14
    // Predicated region
    $region434: #{tpu_custom_call.1} parent=1 // pred_check
      _
    $region435: #{tpu_custom_call.1} parent=1 // pred_check_branch
      %561 = sbr.rel target = $region437
    $region436: #{tpu_custom_call.1} parent=1 // pred_region
      // Predicated region
      $region449: #{tpu_custom_call.1} parent=436 // pred_check
        _
      $region450: #{tpu_custom_call.1} parent=436 // pred_check_branch
        %577 = sbr.rel (0) target = $region452
      $region451: #{tpu_custom_call.1} parent=436 // pred_region
        %s579 = ssub.s32 2, 1
        loop: start=0, step=1, limit=1
        $region453: #{tpu_custom_call.1} parent=451 // loop_pre_header
          _
        $region454: #{tpu_custom_call.1} parent=451 // loop_header
          %s581 = sphi 0, %s585
          %p582 = scmp.ge.s32.totalorder %s581, 1
          %s586 = sphi %s557, %s557
          %s587 = sphi %s558, %s558
        $region455: #{tpu_custom_call.1} parent=451 // loop_header_branch
          %584 = sbr.rel (%p582) target = $region459
        $region456: #{tpu_custom_call.1} parent=451 // loop_body
          %v588 = vld [vmem:[%s586] sm:%s579]
          %589 = vst [vmem:[%s587] sm:%s579] %v588
        $region457: #{tpu_custom_call.1} parent=451 // loop_footer
          %s585 = sadd.s32 1, %s581
        $region458: #{tpu_custom_call.1} parent=451 // loop_footer_branch
          %580 = sbr.rel target = $region454
        $region459: #{tpu_custom_call.1} parent=451 // loop_exit
          _
      $region452: #{tpu_custom_call.1} parent=436 // pred_fallthru
        _
    $region437: #{tpu_custom_call.1} parent=1 // pred_fallthru
      _
    // Predicated region
    $region438: #{tpu_custom_call.1} parent=1 // pred_check
      _
    $region439: #{tpu_custom_call.1} parent=1 // pred_check_branch
      %563 = sbr.rel (0) target = $region441
    $region440: #{tpu_custom_call.1} parent=1 // pred_region
      %s565 = ssub.s32 2, 1
      loop: start=0, step=1, limit=1
      $region442: #{tpu_custom_call.1} parent=440 // loop_pre_header
        _
      $region443: #{tpu_custom_call.1} parent=440 // loop_header
        %s567 = sphi 0, %s571
        %p568 = scmp.ge.s32.totalorder %s567, 1
        %s572 = sphi %s557, %s557
        %s573 = sphi %s558, %s558
      $region444: #{tpu_custom_call.1} parent=440 // loop_header_branch
        %570 = sbr.rel (%p568) target = $region448
      $region445: #{tpu_custom_call.1} parent=440 // loop_body
        %v574 = vld [vmem:[%s572] sm:%s565]
        %575 = vst [vmem:[%s573] sm:%s565] %v574
      $region446: #{tpu_custom_call.1} parent=440 // loop_footer
        %s571 = sadd.s32 1, %s567
      $region447: #{tpu_custom_call.1} parent=440 // loop_footer_branch
        %566 = sbr.rel target = $region443
      $region448: #{tpu_custom_call.1} parent=440 // loop_exit
        _
    $region441: #{tpu_custom_call.1} parent=1 // pred_fallthru
      _
    // Predicated region
    $region460: #{tpu_custom_call.1} parent=1 // pred_check
      _
    $region461: #{tpu_custom_call.1} parent=1 // pred_check_branch
      %592 = sbr.rel (0) target = $region463
    $region462: #{tpu_custom_call.1} parent=1 // pred_region
      %593 = vsyncadd %s559, 16
    $region463: #{tpu_custom_call.1} parent=1 // pred_fallthru
      _
    %s594 = sld [smem:[#allocation4 + $0xf]]
    %s595 = scalar_lea.vmem %s2, %s594
    %s596 = scalar_lea.vmem [#allocation2], 15
    %s597 = scalar_lea.sflag [#allocation3], 15
    // Predicated region
    $region464: #{tpu_custom_call.1} parent=1 // pred_check
      _
    $region465: #{tpu_custom_call.1} parent=1 // pred_check_branch
      %599 = sbr.rel target = $region467
    $region466: #{tpu_custom_call.1} parent=1 // pred_region
      // Predicated region
      $region479: #{tpu_custom_call.1} parent=466 // pred_check
        _
      $region480: #{tpu_custom_call.1} parent=466 // pred_check_branch
        %615 = sbr.rel (0) target = $region482
      $region481: #{tpu_custom_call.1} parent=466 // pred_region
        %s617 = ssub.s32 2, 1
        loop: start=0, step=1, limit=1
        $region483: #{tpu_custom_call.1} parent=481 // loop_pre_header
          _
        $region484: #{tpu_custom_call.1} parent=481 // loop_header
          %s619 = sphi 0, %s623
          %p620 = scmp.ge.s32.totalorder %s619, 1
          %s624 = sphi %s595, %s595
          %s625 = sphi %s596, %s596
        $region485: #{tpu_custom_call.1} parent=481 // loop_header_branch
          %622 = sbr.rel (%p620) target = $region489
        $region486: #{tpu_custom_call.1} parent=481 // loop_body
          %v626 = vld [vmem:[%s624] sm:%s617]
          %627 = vst [vmem:[%s625] sm:%s617] %v626
        $region487: #{tpu_custom_call.1} parent=481 // loop_footer
          %s623 = sadd.s32 1, %s619
        $region488: #{tpu_custom_call.1} parent=481 // loop_footer_branch
          %618 = sbr.rel target = $region484
        $region489: #{tpu_custom_call.1} parent=481 // loop_exit
          _
      $region482: #{tpu_custom_call.1} parent=466 // pred_fallthru
        _
    $region467: #{tpu_custom_call.1} parent=1 // pred_fallthru
      _
    // Predicated region
    $region468: #{tpu_custom_call.1} parent=1 // pred_check
      _
    $region469: #{tpu_custom_call.1} parent=1 // pred_check_branch
      %601 = sbr.rel (0) target = $region471
    $region470: #{tpu_custom_call.1} parent=1 // pred_region
      %s603 = ssub.s32 2, 1
      loop: start=0, step=1, limit=1
      $region472: #{tpu_custom_call.1} parent=470 // loop_pre_header
        _
      $region473: #{tpu_custom_call.1} parent=470 // loop_header
        %s605 = sphi 0, %s609
        %p606 = scmp.ge.s32.totalorder %s605, 1
        %s610 = sphi %s595, %s595
        %s611 = sphi %s596, %s596
      $region474: #{tpu_custom_call.1} parent=470 // loop_header_branch
        %608 = sbr.rel (%p606) target = $region478
      $region475: #{tpu_custom_call.1} parent=470 // loop_body
        %v612 = vld [vmem:[%s610] sm:%s603]
        %613 = vst [vmem:[%s611] sm:%s603] %v612
      $region476: #{tpu_custom_call.1} parent=470 // loop_footer
        %s609 = sadd.s32 1, %s605
      $region477: #{tpu_custom_call.1} parent=470 // loop_footer_branch
        %604 = sbr.rel target = $region473
      $region478: #{tpu_custom_call.1} parent=470 // loop_exit
        _
    $region471: #{tpu_custom_call.1} parent=1 // pred_fallthru
      _
    // Predicated region
    $region490: #{tpu_custom_call.1} parent=1 // pred_check
      _
    $region491: #{tpu_custom_call.1} parent=1 // pred_check_branch
      %630 = sbr.rel (0) target = $region493
    $region492: #{tpu_custom_call.1} parent=1 // pred_region
      %631 = vsyncadd %s597, 16
    $region493: #{tpu_custom_call.1} parent=1 // pred_fallthru
      _
    %s632 = smul.u32 1, 1
    %s633 = sshll.u32 %s632, 4
    %634 = dma.done [#allocation3], %s633
    %s635 = sshll.u32 %s632, 4
    %636 = dma.done %s65, %s635
    %s637 = sshll.u32 %s632, 4
    %638 = dma.done %s103, %s637
    %s639 = sshll.u32 %s632, 4
    %640 = dma.done %s141, %s639
    %s641 = sshll.u32 %s632, 4
    %642 = dma.done %s179, %s641
    %s643 = sshll.u32 %s632, 4
    %644 = dma.done %s217, %s643
    %s645 = sshll.u32 %s632, 4
    %646 = dma.done %s255, %s645
    %s647 = sshll.u32 %s632, 4
    %648 = dma.done %s293, %s647
    %s649 = sshll.u32 %s632, 4
    %650 = dma.done %s331, %s649
    %s651 = sshll.u32 %s632, 4
    %652 = dma.done %s369, %s651
    %s653 = sshll.u32 %s632, 4
    %654 = dma.done %s407, %s653
    %s655 = sshll.u32 %s632, 4
    %656 = dma.done %s445, %s655
    %s657 = sshll.u32 %s632, 4
    %658 = dma.done %s483, %s657
    %s659 = sshll.u32 %s632, 4
    %660 = dma.done %s521, %s659
    %s661 = sshll.u32 %s632, 4
    %662 = dma.done %s559, %s661
    %s663 = sshll.u32 %s632, 4
    %664 = dma.done %s597, %s663
    %v665 = vld [vmem:[#allocation2] sm:$0xff]
    %v666 = vld [vmem:[#allocation2 + $0x8] sm:$0xff]
    %v667 = vld [vmem:[%s1] sm:$0x1]
    %v669 = vperm.slane %v667, 0
    %v671 = vadd.f32 %v665, %v669
    %v672 = vadd.f32 %v666, %v669
    %vm673 = vcmask 261120
    %674 = vst.msk [vmem:[#allocation7] sm:$0xff] %vm673, %v671
    %675 = vst.msk [vmem:[#allocation7 + $0x8] sm:$0xff] %vm673, %v672
    // Predicated region
    $region494: #{tpu_custom_call.1} parent=1 // pred_check
      _
    $region495: #{tpu_custom_call.1} parent=1 // pred_check_branch
      %677 = sbr.rel (0) target = $region497
    $region496: #{tpu_custom_call.1} parent=1 // pred_region
      %679 = vsyncadd [#allocation5], 0
      %s680 = sshll.u32 [#allocation7], 4
      %s681 = int_to_ptr.vmem [resolvable:$true] %s680
      %s682 = sshll.u32 %s3, 4
      %s683 = int_to_ptr.hbm [resolvable:$true] %s682
      %688 = dma.vmem_to_hbm [thread:$0]  %s681, 256, %s683, [#allocation5], 128, 128, 8
    $region497: #{tpu_custom_call.1} parent=1 // pred_fallthru
      _
    // Predicated region
    $region498: #{tpu_custom_call.1} parent=1 // pred_check
      _
    $region499: #{tpu_custom_call.1} parent=1 // pred_check_branch
      %690 = sbr.rel (0) target = $region501
    $region500: #{tpu_custom_call.1} parent=1 // pred_region
      %692 = dma.done [#allocation5], 256
    $region501: #{tpu_custom_call.1} parent=1 // pred_fallthru
      _
    %693 = vsyncpa [#allocation5], 1
    %694 = vsyncpa [#allocation6], 1
  %695 = vsyncmov [#allocation3]
  %s696 = vpop.sfrf %695
  %p697 = scmp.eq.s32.totalorder %s696, 0
  %p698 = pneg %p697
  %700 = shalt.err (%p698)
  %s701 = scalar_lea.sflag [#allocation3], 1
  %702 = vsyncmov %s701
  %s703 = vpop.sfrf %702
  %p704 = scmp.eq.s32.totalorder %s703, 0
  %p705 = pneg %p704
  %707 = shalt.err (%p705)
  %s708 = scalar_lea.sflag [#allocation3], 2
  %709 = vsyncmov %s708
  %s710 = vpop.sfrf %709
  %p711 = scmp.eq.s32.totalorder %s710, 0
  %p712 = pneg %p711
  %714 = shalt.err (%p712)
  %s715 = scalar_lea.sflag [#allocation3], 3
  %716 = vsyncmov %s715
  %s717 = vpop.sfrf %716
  %p718 = scmp.eq.s32.totalorder %s717, 0
  %p719 = pneg %p718
  %721 = shalt.err (%p719)
  %s722 = scalar_lea.sflag [#allocation3], 4
  %723 = vsyncmov %s722
  %s724 = vpop.sfrf %723
  %p725 = scmp.eq.s32.totalorder %s724, 0
  %p726 = pneg %p725
  %728 = shalt.err (%p726)
  %s729 = scalar_lea.sflag [#allocation3], 5
  %730 = vsyncmov %s729
  %s731 = vpop.sfrf %730
  %p732 = scmp.eq.s32.totalorder %s731, 0
  %p733 = pneg %p732
  %735 = shalt.err (%p733)
  %s736 = scalar_lea.sflag [#allocation3], 6
  %737 = vsyncmov %s736
  %s738 = vpop.sfrf %737
  %p739 = scmp.eq.s32.totalorder %s738, 0
  %p740 = pneg %p739
  %742 = shalt.err (%p740)
  %s743 = scalar_lea.sflag [#allocation3], 7
  %744 = vsyncmov %s743
  %s745 = vpop.sfrf %744
  %p746 = scmp.eq.s32.totalorder %s745, 0
  %p747 = pneg %p746
  %749 = shalt.err (%p747)
  %s750 = scalar_lea.sflag [#allocation3], 8
  %751 = vsyncmov %s750
  %s752 = vpop.sfrf %751
  %p753 = scmp.eq.s32.totalorder %s752, 0
  %p754 = pneg %p753
  %756 = shalt.err (%p754)
  %s757 = scalar_lea.sflag [#allocation3], 9
  %758 = vsyncmov %s757
  %s759 = vpop.sfrf %758
  %p760 = scmp.eq.s32.totalorder %s759, 0
  %p761 = pneg %p760
  %763 = shalt.err (%p761)
  %s764 = scalar_lea.sflag [#allocation3], 10
  %765 = vsyncmov %s764
  %s766 = vpop.sfrf %765
  %p767 = scmp.eq.s32.totalorder %s766, 0
  %p768 = pneg %p767
  %770 = shalt.err (%p768)
  %s771 = scalar_lea.sflag [#allocation3], 11
  %772 = vsyncmov %s771
  %s773 = vpop.sfrf %772
  %p774 = scmp.eq.s32.totalorder %s773, 0
  %p775 = pneg %p774
  %777 = shalt.err (%p775)
  %s778 = scalar_lea.sflag [#allocation3], 12
  %779 = vsyncmov %s778
  %s780 = vpop.sfrf %779
  %p781 = scmp.eq.s32.totalorder %s780, 0
  %p782 = pneg %p781
  %784 = shalt.err (%p782)
  %s785 = scalar_lea.sflag [#allocation3], 13
  %786 = vsyncmov %s785
  %s787 = vpop.sfrf %786
  %p788 = scmp.eq.s32.totalorder %s787, 0
  %p789 = pneg %p788
  %791 = shalt.err (%p789)
  %s792 = scalar_lea.sflag [#allocation3], 14
  %793 = vsyncmov %s792
  %s794 = vpop.sfrf %793
  %p795 = scmp.eq.s32.totalorder %s794, 0
  %p796 = pneg %p795
  %798 = shalt.err (%p796)
  %s799 = scalar_lea.sflag [#allocation3], 15
  %800 = vsyncmov %s799
  %s801 = vpop.sfrf %800
  %p802 = scmp.eq.s32.totalorder %s801, 0
  %p803 = pneg %p802
  %805 = shalt.err (%p803)

</llo_original>
